<compile_context>
chip_gen: v7x
topology: tpu7x:2x2x1
jax: 0.10.0
libtpu: 0.0.40
codegen_flags: <defaults>
</compile_context>

<pallas_src>
import functools

import jax
import jax.numpy as jnp
from jax.experimental import pallas as pl
from jax.experimental.pallas import tpu as pltpu

EPS = 1e-5                # PyTorch nn.LayerNorm default
EXACT_SOFTMAX = False     # set True for strict parity tests (exact divide)

_VMEM_LIMIT = None


def _vmem_limit_bytes():
    """Scoped-VMEM request with headroom: 96 MiB on v5e/v6e, 48 MiB on v7x."""
    global _VMEM_LIMIT
    if _VMEM_LIMIT is None:
        try:
            cap = int(pltpu.get_tpu_info().vmem_capacity_bytes)
        except Exception:                              # unknown chip / interpret
            cap = 64 * 1024 * 1024
        cap = min(cap, 128 * 1024 * 1024)
        _VMEM_LIMIT = max(32 * 1024 * 1024, (cap * 3) // 4)
    return _VMEM_LIMIT


def _round_up(x, m):
    return (x + m - 1) // m * m


def _layernorm(x, g, b):
    mu = jnp.mean(x, axis=-1, keepdims=True)
    var = jnp.mean((x - mu) ** 2, axis=-1, keepdims=True)
    return (x - mu) * jax.lax.rsqrt(var + EPS) * g + b


def _erf(x):
    # Abramowitz & Stegun 7.1.26 rational approximation, |err| <= 1.5e-7
    # (well below bf16 matmul noise) -- uses only exp/mul/add/div so it lowers
    # cleanly on the VPU/EUP, unlike an erf primitive.
    a1, a2, a3, a4, a5 = 0.254829592, -0.284496736, 1.421413741, -1.453152027, 1.061405429
    pc = 0.3275911
    s = jnp.where(x >= 0.0, 1.0, -1.0)
    ax = jnp.abs(x)
    t = 1.0 / (1.0 + pc * ax)
    poly = ((((a5 * t + a4) * t + a3) * t + a2) * t + a1) * t
    return s * (1.0 - poly * jnp.exp(-ax * ax))


def _gelu_exact(x):
    # PyTorch nn.GELU() default (erf-based, not tanh approximation).
    return 0.5 * x * (1.0 + _erf(x * 0.7071067811865476))


# ---------------------------------------------------------------------------
# Kernel 1: patch embedding  (LN -> Linear(bf16) -> LN), one batch elem / step
# ---------------------------------------------------------------------------
def patch_embed_kernel(p_ref, g1_ref, b1_ref, w_ref, wb_ref, g2_ref, b2_ref, o_ref):
    h = _layernorm(p_ref[0], g1_ref[...], b1_ref[...])                 # f32
    y = jnp.dot(h.astype(jnp.bfloat16), w_ref[...],
                preferred_element_type=jnp.float32) + wb_ref[...]
    o_ref[0] = _layernorm(y, g2_ref[...], b2_ref[...])


def patch_embed(patches, pp):
    b, n, pd = patches.shape
    dim = pp["w"].shape[1]
    cmap = lambda i: (0, 0)
    return pl.pallas_call(
        patch_embed_kernel,
        out_shape=jax.ShapeDtypeStruct((b, n, dim), jnp.float32),
        grid=(b,),
        in_specs=[
            pl.BlockSpec((1, n, pd), lambda i: (i, 0, 0)),
            pl.BlockSpec((1, pd), cmap), pl.BlockSpec((1, pd), cmap),
            pl.BlockSpec((pd, dim), cmap), pl.BlockSpec((1, dim), cmap),
            pl.BlockSpec((1, dim), cmap), pl.BlockSpec((1, dim), cmap),
        ],
        out_specs=pl.BlockSpec((1, n, dim), lambda i: (i, 0, 0)),
        compiler_params=pltpu.CompilerParams(
            dimension_semantics=("parallel",),
            vmem_limit_bytes=_vmem_limit_bytes()),
    )(patches, pp["ln1_g"], pp["ln1_b"], pp["w"], pp["b"], pp["ln2_g"], pp["ln2_b"])


# ---------------------------------------------------------------------------
# Kernel 2: ONE fused transformer layer per pallas_call.
#   Residual stream x stays in VMEM across attention + MLP; only the updated
#   residual goes back to HBM (aliased in place).
# ---------------------------------------------------------------------------
def layer_kernel(x_ref, ag_ref, ab_ref, wqkv_ref, wo_ref, bo_ref,
                 fg_ref, fb_ref, w1_ref, b1_ref, w2_ref, b2_ref, o_ref,
                 *, heads, dim_head, n_valid):
    x = x_ref[0]                                       # (n_pad, d) f32 residual
    n_pad = x.shape[0]
    inner = heads * dim_head

    # ---- attention (pre-LN) -------------------------------------------------
    h = _layernorm(x, ag_ref[...], ab_ref[...]).astype(jnp.bfloat16)
    # Single fused (d, 3*inner) matmul; softmax scale already folded into the
    # q columns of wqkv (see prepare_params).
    qkv = jnp.dot(h, wqkv_ref[...], preferred_element_type=jnp.float32)

    def heads_split(t):     # (n_pad, inner) -> (heads, n_pad, dim_head), in VMEM
        return jnp.stack([t[:, hh * dim_head:(hh + 1) * dim_head]
                          for hh in range(heads)], axis=0)

    qh = heads_split(qkv[:, :inner]).astype(jnp.bfloat16)
    kh = heads_split(qkv[:, inner:2 * inner]).astype(jnp.bfloat16)
    vh = heads_split(qkv[:, 2 * inner:]).astype(jnp.bfloat16)

    # TODO(synk): for long sequences / v7x, replace this monolithic
    # (heads, N, N) score tensor with flash-style KV-block tiling (online
    # softmax) and a parallel q-tile grid axis.
    dots = jnp.einsum("hqd,hkd->hqk", qh, kh,
                      preferred_element_type=jnp.float32)        # f32 scores
    if n_valid < n_pad:                                # mask padded key columns
        key_ok = jax.lax.broadcasted_iota(jnp.int32, dots.shape, 2) < n_valid
        dots = jnp.where(key_ok, dots, -1e30)
    dots = dots - jnp.max(dots, axis=-1, keepdims=True)
    e = jnp.exp(dots)
    denom = jnp.sum(e, axis=-1, keepdims=True)
    if EXACT_SOFTMAX:
        p = e / denom
    else:
        p = e * pl.reciprocal(denom, approx=True)                # EUP
    ctx = jnp.einsum("hqk,hkd->hqd", p.astype(jnp.bfloat16), vh,
                     preferred_element_type=jnp.float32)         # (heads, n, dh)
    # Merge heads back on the VMEM tile -> lane-dense (n_pad, inner) store path.
    ctx = jnp.concatenate([ctx[hh] for hh in range(heads)],
                          axis=-1).astype(jnp.bfloat16)
    x = x + jnp.dot(ctx, wo_ref[...],
                    preferred_element_type=jnp.float32) + bo_ref[...]

    # ---- feed-forward (pre-LN, exact-erf GELU) ------------------------------
    hf = _layernorm(x, fg_ref[...], fb_ref[...]).astype(jnp.bfloat16)
    h1 = jnp.dot(hf, w1_ref[...], preferred_element_type=jnp.float32) + b1_ref[...]
    h1 = _gelu_exact(h1).astype(jnp.bfloat16)
    h2 = jnp.dot(h1, w2_ref[...], preferred_element_type=jnp.float32) + b2_ref[...]
    o_ref[0] = x + h2


def transformer_layer(x, lp, *, heads, dim_head, n_valid):
    b, n_pad, d = x.shape
    inner = heads * dim_head
    mlp = lp["w1"].shape[1]
    kern = functools.partial(layer_kernel, heads=heads, dim_head=dim_head,
                             n_valid=n_valid)
    cmap = lambda i: (0, 0)
    # TODO(synk): on v7x with realistic dims, mark the constant-index weight
    # specs pipeline_mode=pl.Buffered(1) (they never change across grid steps)
    # to avoid double-buffering ~18 MiB of MLP weights.
    return pl.pallas_call(
        kern,
        out_shape=jax.ShapeDtypeStruct((b, n_pad, d), jnp.float32),
        grid=(b,),
        in_specs=[
            pl.BlockSpec((1, n_pad, d), lambda i: (i, 0, 0)),    # residual x
            pl.BlockSpec((1, d), cmap), pl.BlockSpec((1, d), cmap),   # attn LN
            pl.BlockSpec((d, 3 * inner), cmap),                  # fused wqkv (bf16)
            pl.BlockSpec((inner, d), cmap), pl.BlockSpec((1, d), cmap),  # out proj
            pl.BlockSpec((1, d), cmap), pl.BlockSpec((1, d), cmap),     # ff LN
            pl.BlockSpec((d, mlp), cmap), pl.BlockSpec((1, mlp), cmap), # W1, b1
            pl.BlockSpec((mlp, d), cmap), pl.BlockSpec((1, d), cmap),   # W2, b2
        ],
        out_specs=pl.BlockSpec((1, n_pad, d), lambda i: (i, 0, 0)),
        input_output_aliases={0: 0},          # update the residual stream in place
        compiler_params=pltpu.CompilerParams(
            dimension_semantics=("parallel",),
            vmem_limit_bytes=_vmem_limit_bytes()),
    )(x, lp["attn_ln_g"], lp["attn_ln_b"], lp["wqkv"],
      lp["wo"], lp["bo"], lp["ff_ln_g"], lp["ff_ln_b"],
      lp["w1"], lp["b1"], lp["w2"], lp["b2"])


# ---------------------------------------------------------------------------
# Full forward pass (mirrors TransformerEncoder3D.forward)
# ---------------------------------------------------------------------------
def transformer_encoder_3d(video, params, *, patch_size, heads, dim_head):
    b, c, F_, H_, W_ = video.shape
    p = patch_size
    f, h, w = F_ // p, H_ // p, W_ // p
    # Rearrange 'b c (f pf) (h p1) (w p2) -> b (f h w) (p1 p2 pf c)'
    # TODO(synk): fold this rearrange (and the cls-concat + pos add below) into
    # patch_embed via an (f,h,w) grid index_map to avoid the HBM materialization.
    x = video.reshape(b, c, f, p, h, p, w, p)
    x = jnp.transpose(x, (0, 2, 4, 6, 5, 7, 3, 1))               # b f h w p1 p2 pf c
    x = x.reshape(b, f * h * w, p * p * p * c)

    x = patch_embed(x, params["patch"])                          # (b, n, dim) f32
    n, dim = x.shape[1], x.shape[2]

    cls = jnp.broadcast_to(params["cls_token"], (b, 1, dim))
    x = jnp.concatenate([cls, x], axis=1) + params["pos_embedding"][:, :n + 1]
    # Dropout / emb_dropout are p=0.0 (eval) -> identity, not emitted.

    # Pad sequence to a bf16-sublane-friendly length; padded keys are masked in
    # attention, padded query rows are garbage-but-dropped (benign).
    n_tok = n + 1
    n_pad = _round_up(n_tok, 16) if n_tok <= 512 else _round_up(n_tok, 128)
    x = jnp.pad(x, ((0, 0), (0, n_pad - n_tok), (0, 0)))

    for lp in params["layers"]:
        x = transformer_layer(x, lp, heads=heads, dim_head=dim_head, n_valid=n_tok)

    return x[:, 1:n_tok, :]                                      # drop cls + padding


# ---------------------------------------------------------------------------
# Parameter prep: done ONCE outside the jitted forward (pre-cast to bf16,
# fold softmax scale into wq, reshape vectors to (1, -1)).
# ---------------------------------------------------------------------------
def prepare_params(params, *, heads, dim_head):
    inner = heads * dim_head
    scale = dim_head ** -0.5
    vec = lambda a: a.reshape(1, -1).astype(jnp.float32)
    pp = params["patch"]
    out = {
        "patch": {
            "ln1_g": vec(pp["ln1_g"]), "ln1_b": vec(pp["ln1_b"]),
            "w": pp["w"].astype(jnp.bfloat16), "b": vec(pp["b"]),
            "ln2_g": vec(pp["ln2_g"]), "ln2_b": vec(pp["ln2_b"]),
        },
        "pos_embedding": params["pos_embedding"].astype(jnp.float32),
        "cls_token": params["cls_token"].astype(jnp.float32),
        "layers": [],
    }
    for lp in params["layers"]:
        wqkv = lp["wqkv"]
        wqkv = jnp.concatenate([wqkv[:, :inner] * scale, wqkv[:, inner:]], axis=1)
        out["layers"].append({
            "attn_ln_g": vec(lp["attn_ln_g"]), "attn_ln_b": vec(lp["attn_ln_b"]),
            "wqkv": wqkv.astype(jnp.bfloat16),
            "wo": lp["wo"].astype(jnp.bfloat16), "bo": vec(lp["bo"]),
            "ff_ln_g": vec(lp["ff_ln_g"]), "ff_ln_b": vec(lp["ff_ln_b"]),
            "w1": lp["w1"].astype(jnp.bfloat16), "b1": vec(lp["b1"]),
            "w2": lp["w2"].astype(jnp.bfloat16), "b2": vec(lp["b2"]),
        })
    return out


# ---------------------------------------------------------------------------
# Deterministic synthetic parameters
# ---------------------------------------------------------------------------
def init_params(key, *, image_size, patch_size, dim, depth, heads, dim_head,
                mlp_dim, channels):
    num_patches = (image_size // patch_size) ** 3
    patch_dim = channels * patch_size ** 3
    inner = heads * dim_head

    def nrm(k, shape, scale=0.02):
        return scale * jax.random.normal(k, shape, dtype=jnp.float32)

    keys = jax.random.split(key, 4 + depth)
    params = {
        "patch": {
            "ln1_g": jnp.ones((patch_dim,), jnp.float32),
            "ln1_b": jnp.zeros((patch_dim,), jnp.float32),
            "w": nrm(keys[0], (patch_dim, dim)),
            "b": jnp.zeros((dim,), jnp.float32),
            "ln2_g": jnp.ones((dim,), jnp.float32),
            "ln2_b": jnp.zeros((dim,), jnp.float32),
        },
        "pos_embedding": jax.random.normal(keys[1], (1, num_patches + 1, dim),
                                           dtype=jnp.float32),
        "cls_token": jax.random.normal(keys[2], (1, 1, dim), dtype=jnp.float32),
        "layers": [],
    }
    for l in range(depth):
        lk = jax.random.split(keys[4 + l], 4)
        params["layers"].append({
            "attn_ln_g": jnp.ones((dim,), jnp.float32),
            "attn_ln_b": jnp.zeros((dim,), jnp.float32),
            "wqkv": nrm(lk[0], (dim, 3 * inner)),
            "wo": nrm(lk[1], (inner, dim)),
            "bo": jnp.zeros((dim,), jnp.float32),
            "ff_ln_g": jnp.ones((dim,), jnp.float32),
            "ff_ln_b": jnp.zeros((dim,), jnp.float32),
            "w1": nrm(lk[2], (dim, mlp_dim)),
            "b1": jnp.zeros((mlp_dim,), jnp.float32),
            "w2": nrm(lk[3], (mlp_dim, dim)),
            "b2": jnp.zeros((dim,), jnp.float32),
        })
    return params


if __name__ == "__main__":
    # Small config: image_size=8, patch_size=4 -> num_patches = 2^3 = 8, seq = 9
    image_size, patch_size, channels = 8, 4, 3
    dim, depth, heads, dim_head, mlp_dim = 32, 2, 2, 16, 64
    batch = 2

    key = jax.random.PRNGKey(0)
    pkey, vkey = jax.random.split(key)
    raw_params = init_params(pkey, image_size=image_size, patch_size=patch_size,
                             dim=dim, depth=depth, heads=heads, dim_head=dim_head,
                             mlp_dim=mlp_dim, channels=channels)
    params = prepare_params(raw_params, heads=heads, dim_head=dim_head)

    video = jax.random.normal(
        vkey, (batch, channels, image_size, image_size, image_size),
        dtype=jnp.float32)

    fwd = jax.jit(functools.partial(transformer_encoder_3d,
                                    patch_size=patch_size, heads=heads,
                                    dim_head=dim_head))
    out = jax.block_until_ready(fwd(video, params))
    assert out.shape == (batch, (image_size // patch_size) ** 3, dim), out.shape
    assert bool(jnp.all(jnp.isfinite(out)))
    print("KERNEL_OK")
</pallas_src>

<mosaic_0001>
module attributes {stable_mosaic.version = 11 : i64} {
  func.func @patch_embed_kernel(%arg0: i32, %arg1: memref<1x8x192xf32, #tpu.memory_space<vmem>>, %arg2: memref<1x192xf32, #tpu.memory_space<vmem>>, %arg3: memref<1x192xf32, #tpu.memory_space<vmem>>, %arg4: memref<192x32xbf16, #tpu.memory_space<vmem>>, %arg5: memref<1x32xf32, #tpu.memory_space<vmem>>, %arg6: memref<1x32xf32, #tpu.memory_space<vmem>>, %arg7: memref<1x32xf32, #tpu.memory_space<vmem>>, %arg8: memref<1x8x32xf32, #tpu.memory_space<vmem>>) attributes {dimension_semantics = [#tpu.dimension_semantics<parallel>], iteration_bounds = array<i64: 2>, scalar_prefetch = 0 : i64, scratch_operands = 0 : i64, tpu.core_type = #tpu.core_type<tc>, window_params = [{transform_indices = @transform_0, window_bounds = array<i64: 1, 8, 192>}, {pipeline_mode = #tpu.pipeline_mode<synchronous>, transform_indices = @transform_1, window_bounds = array<i64: 1, 192>}, {pipeline_mode = #tpu.pipeline_mode<synchronous>, transform_indices = @transform_2, window_bounds = array<i64: 1, 192>}, {pipeline_mode = #tpu.pipeline_mode<synchronous>, transform_indices = @transform_3, window_bounds = array<i64: 192, 32>}, {pipeline_mode = #tpu.pipeline_mode<synchronous>, transform_indices = @transform_4, window_bounds = array<i64: 1, 32>}, {pipeline_mode = #tpu.pipeline_mode<synchronous>, transform_indices = @transform_5, window_bounds = array<i64: 1, 32>}, {pipeline_mode = #tpu.pipeline_mode<synchronous>, transform_indices = @transform_6, window_bounds = array<i64: 1, 32>}, {transform_indices = @transform_7, window_bounds = array<i64: 1, 8, 32>}]} {
    %c0 = arith.constant 0 : index
    %c0_0 = arith.constant 0 : index
    %c0_1 = arith.constant 0 : index
    %0 = vector.load %arg1[%c0, %c0_0, %c0_1] : memref<1x8x192xf32, #tpu.memory_space<vmem>>, vector<1x8x192xf32>
    %1 = vector.shape_cast %0 : vector<1x8x192xf32> to vector<8x192xf32>
    %c0_2 = arith.constant 0 : index
    %c0_3 = arith.constant 0 : index
    %2 = vector.load %arg2[%c0_2, %c0_3] : memref<1x192xf32, #tpu.memory_space<vmem>>, vector<1x192xf32>
    %c0_4 = arith.constant 0 : index
    %c0_5 = arith.constant 0 : index
    %3 = vector.load %arg3[%c0_4, %c0_5] : memref<1x192xf32, #tpu.memory_space<vmem>>, vector<1x192xf32>
    %cst = arith.constant dense<0.000000e+00> : vector<8xf32>
    %4 = vector.multi_reduction <add>, %1, %cst [1] : vector<8x192xf32> to vector<8xf32>
    %5 = vector.shape_cast %4 : vector<8xf32> to vector<8x1xf32>
    %cst_6 = arith.constant 1.920000e+02 : f32
    %6 = vector.broadcast %cst_6 : f32 to vector<8x1xf32>
    %7 = arith.divf %5, %6 : vector<8x1xf32>
    %8 = vector.broadcast %7 : vector<8x1xf32> to vector<8x192xf32>
    %9 = arith.subf %1, %8 : vector<8x192xf32>
    %10 = arith.mulf %9, %9 : vector<8x192xf32>
    %cst_7 = arith.constant dense<0.000000e+00> : vector<8xf32>
    %11 = vector.multi_reduction <add>, %10, %cst_7 [1] : vector<8x192xf32> to vector<8xf32>
    %12 = vector.shape_cast %11 : vector<8xf32> to vector<8x1xf32>
    %cst_8 = arith.constant 1.920000e+02 : f32
    %13 = vector.broadcast %cst_8 : f32 to vector<8x1xf32>
    %14 = arith.divf %12, %13 : vector<8x1xf32>
    %15 = vector.broadcast %7 : vector<8x1xf32> to vector<8x192xf32>
    %16 = arith.subf %1, %15 : vector<8x192xf32>
    %cst_9 = arith.constant 9.99999974E-6 : f32
    %17 = vector.broadcast %cst_9 : f32 to vector<8x1xf32>
    %18 = arith.addf %14, %17 : vector<8x1xf32>
    %19 = math.rsqrt %18 : vector<8x1xf32>
    %20 = vector.broadcast %19 : vector<8x1xf32> to vector<8x192xf32>
    %21 = arith.mulf %16, %20 : vector<8x192xf32>
    %22 = vector.broadcast %2 : vector<1x192xf32> to vector<8x192xf32>
    %23 = arith.mulf %21, %22 : vector<8x192xf32>
    %24 = vector.broadcast %3 : vector<1x192xf32> to vector<8x192xf32>
    %25 = arith.addf %23, %24 : vector<8x192xf32>
    %26 = arith.truncf %25 : vector<8x192xf32> to vector<8x192xbf16>
    %c0_10 = arith.constant 0 : index
    %c0_11 = arith.constant 0 : index
    %27 = vector.load %arg4[%c0_10, %c0_11] : memref<192x32xbf16, #tpu.memory_space<vmem>>, vector<192x32xbf16>
    %cst_12 = arith.constant dense<0.000000e+00> : vector<8x32xf32>
    %28 = tpu.matmul %26, %27, %cst_12 {dimension_numbers = #tpu.dot_dimension_numbers<[1], [0], [0], [1], [0, 0, 1, 1], [], []>} : vector<8x192xbf16>, vector<192x32xbf16>, vector<8x32xf32> -> vector<8x32xf32>
    %c0_13 = arith.constant 0 : index
    %c0_14 = arith.constant 0 : index
    %29 = vector.load %arg5[%c0_13, %c0_14] : memref<1x32xf32, #tpu.memory_space<vmem>>, vector<1x32xf32>
    %30 = vector.broadcast %29 : vector<1x32xf32> to vector<8x32xf32>
    %31 = arith.addf %28, %30 : vector<8x32xf32>
    %c0_15 = arith.constant 0 : index
    %c0_16 = arith.constant 0 : index
    %32 = vector.load %arg6[%c0_15, %c0_16] : memref<1x32xf32, #tpu.memory_space<vmem>>, vector<1x32xf32>
    %c0_17 = arith.constant 0 : index
    %c0_18 = arith.constant 0 : index
    %33 = vector.load %arg7[%c0_17, %c0_18] : memref<1x32xf32, #tpu.memory_space<vmem>>, vector<1x32xf32>
    %cst_19 = arith.constant dense<0.000000e+00> : vector<8xf32>
    %34 = vector.multi_reduction <add>, %31, %cst_19 [1] : vector<8x32xf32> to vector<8xf32>
    %35 = vector.shape_cast %34 : vector<8xf32> to vector<8x1xf32>
    %cst_20 = arith.constant 3.200000e+01 : f32
    %36 = vector.broadcast %cst_20 : f32 to vector<8x1xf32>
    %37 = arith.divf %35, %36 : vector<8x1xf32>
    %38 = vector.broadcast %37 : vector<8x1xf32> to vector<8x32xf32>
    %39 = arith.subf %31, %38 : vector<8x32xf32>
    %40 = arith.mulf %39, %39 : vector<8x32xf32>
    %cst_21 = arith.constant dense<0.000000e+00> : vector<8xf32>
    %41 = vector.multi_reduction <add>, %40, %cst_21 [1] : vector<8x32xf32> to vector<8xf32>
    %42 = vector.shape_cast %41 : vector<8xf32> to vector<8x1xf32>
    %cst_22 = arith.constant 3.200000e+01 : f32
    %43 = vector.broadcast %cst_22 : f32 to vector<8x1xf32>
    %44 = arith.divf %42, %43 : vector<8x1xf32>
    %45 = vector.broadcast %37 : vector<8x1xf32> to vector<8x32xf32>
    %46 = arith.subf %31, %45 : vector<8x32xf32>
    %cst_23 = arith.constant 9.99999974E-6 : f32
    %47 = vector.broadcast %cst_23 : f32 to vector<8x1xf32>
    %48 = arith.addf %44, %47 : vector<8x1xf32>
    %49 = math.rsqrt %48 : vector<8x1xf32>
    %50 = vector.broadcast %49 : vector<8x1xf32> to vector<8x32xf32>
    %51 = arith.mulf %46, %50 : vector<8x32xf32>
    %52 = vector.broadcast %32 : vector<1x32xf32> to vector<8x32xf32>
    %53 = arith.mulf %51, %52 : vector<8x32xf32>
    %54 = vector.broadcast %33 : vector<1x32xf32> to vector<8x32xf32>
    %55 = arith.addf %53, %54 : vector<8x32xf32>
    %c0_24 = arith.constant 0 : index
    %c0_25 = arith.constant 0 : index
    %c0_26 = arith.constant 0 : index
    %56 = vector.load %arg8[%c0_24, %c0_25, %c0_26] : memref<1x8x32xf32, #tpu.memory_space<vmem>>, vector<1x8x32xf32>
    %57 = vector.shape_cast %56 : vector<1x8x32xf32> to vector<8x32xf32>
    %58 = vector.shape_cast %55 : vector<8x32xf32> to vector<1x8x32xf32>
    tpu.vector_store %arg8[%c0_24, %c0_25, %c0_26], %58 {strides = array<i32>} : memref<1x8x32xf32, #tpu.memory_space<vmem>>, vector<1x8x32xf32>,
    return
  }
  func.func @transform_0(%arg0: i32) -> (i32, i32, i32) {
    %c0_i32 = arith.constant 0 : i32
    %c0_i32_0 = arith.constant 0 : i32
    %c0_i32_1 = arith.constant 0 : i32
    return %arg0, %c0_i32, %c0_i32_0 : i32, i32, i32
  }
  func.func @transform_1(%arg0: i32) -> (i32, i32) {
    %c0_i32 = arith.constant 0 : i32
    %c0_i32_0 = arith.constant 0 : i32
    %c0_i32_1 = arith.constant 0 : i32
    return %c0_i32, %c0_i32_0 : i32, i32
  }
  func.func @transform_2(%arg0: i32) -> (i32, i32) {
    %c0_i32 = arith.constant 0 : i32
    %c0_i32_0 = arith.constant 0 : i32
    %c0_i32_1 = arith.constant 0 : i32
    return %c0_i32, %c0_i32_0 : i32, i32
  }
  func.func @transform_3(%arg0: i32) -> (i32, i32) {
    %c0_i32 = arith.constant 0 : i32
    %c0_i32_0 = arith.constant 0 : i32
    %c0_i32_1 = arith.constant 0 : i32
    return %c0_i32, %c0_i32_0 : i32, i32
  }
  func.func @transform_4(%arg0: i32) -> (i32, i32) {
    %c0_i32 = arith.constant 0 : i32
    %c0_i32_0 = arith.constant 0 : i32
    %c0_i32_1 = arith.constant 0 : i32
    return %c0_i32, %c0_i32_0 : i32, i32
  }
  func.func @transform_5(%arg0: i32) -> (i32, i32) {
    %c0_i32 = arith.constant 0 : i32
    %c0_i32_0 = arith.constant 0 : i32
    %c0_i32_1 = arith.constant 0 : i32
    return %c0_i32, %c0_i32_0 : i32, i32
  }
  func.func @transform_6(%arg0: i32) -> (i32, i32) {
    %c0_i32 = arith.constant 0 : i32
    %c0_i32_0 = arith.constant 0 : i32
    %c0_i32_1 = arith.constant 0 : i32
    return %c0_i32, %c0_i32_0 : i32, i32
  }
  func.func @transform_7(%arg0: i32) -> (i32, i32, i32) {
    %c0_i32 = arith.constant 0 : i32
    %c0_i32_0 = arith.constant 0 : i32
    %c0_i32_1 = arith.constant 0 : i32
    return %arg0, %c0_i32, %c0_i32_0 : i32, i32, i32
  }
}

module attributes {stable_mosaic.version = 11 : i64} {
  func.func @layer_kernel(%arg0: i32, %arg1: memref<1x16x32xf32, #tpu.memory_space<vmem>>, %arg2: memref<1x32xf32, #tpu.memory_space<vmem>>, %arg3: memref<1x32xf32, #tpu.memory_space<vmem>>, %arg4: memref<32x96xbf16, #tpu.memory_space<vmem>>, %arg5: memref<32x32xbf16, #tpu.memory_space<vmem>>, %arg6: memref<1x32xf32, #tpu.memory_space<vmem>>, %arg7: memref<1x32xf32, #tpu.memory_space<vmem>>, %arg8: memref<1x32xf32, #tpu.memory_space<vmem>>, %arg9: memref<32x64xbf16, #tpu.memory_space<vmem>>, %arg10: memref<1x64xf32, #tpu.memory_space<vmem>>, %arg11: memref<64x32xbf16, #tpu.memory_space<vmem>>, %arg12: memref<1x32xf32, #tpu.memory_space<vmem>>, %arg13: memref<1x16x32xf32, #tpu.memory_space<vmem>>) attributes {dimension_semantics = [#tpu.dimension_semantics<parallel>], iteration_bounds = array<i64: 2>, scalar_prefetch = 0 : i64, scratch_operands = 0 : i64, tpu.core_type = #tpu.core_type<tc>, window_params = [{transform_indices = @transform_0, window_bounds = array<i64: 1, 16, 32>}, {pipeline_mode = #tpu.pipeline_mode<synchronous>, transform_indices = @transform_1, window_bounds = array<i64: 1, 32>}, {pipeline_mode = #tpu.pipeline_mode<synchronous>, transform_indices = @transform_2, window_bounds = array<i64: 1, 32>}, {pipeline_mode = #tpu.pipeline_mode<synchronous>, transform_indices = @transform_3, window_bounds = array<i64: 32, 96>}, {pipeline_mode = #tpu.pipeline_mode<synchronous>, transform_indices = @transform_4, window_bounds = array<i64: 32, 32>}, {pipeline_mode = #tpu.pipeline_mode<synchronous>, transform_indices = @transform_5, window_bounds = array<i64: 1, 32>}, {pipeline_mode = #tpu.pipeline_mode<synchronous>, transform_indices = @transform_6, window_bounds = array<i64: 1, 32>}, {pipeline_mode = #tpu.pipeline_mode<synchronous>, transform_indices = @transform_7, window_bounds = array<i64: 1, 32>}, {pipeline_mode = #tpu.pipeline_mode<synchronous>, transform_indices = @transform_8, window_bounds = array<i64: 32, 64>}, {pipeline_mode = #tpu.pipeline_mode<synchronous>, transform_indices = @transform_9, window_bounds = array<i64: 1, 64>}, {pipeline_mode = #tpu.pipeline_mode<synchronous>, transform_indices = @transform_10, window_bounds = array<i64: 64, 32>}, {pipeline_mode = #tpu.pipeline_mode<synchronous>, transform_indices = @transform_11, window_bounds = array<i64: 1, 32>}, {transform_indices = @transform_12, window_bounds = array<i64: 1, 16, 32>}]} {
    %c0 = arith.constant 0 : index
    %c0_0 = arith.constant 0 : index
    %c0_1 = arith.constant 0 : index
    %0 = vector.load %arg1[%c0, %c0_0, %c0_1] : memref<1x16x32xf32, #tpu.memory_space<vmem>>, vector<1x16x32xf32>
    %1 = vector.shape_cast %0 : vector<1x16x32xf32> to vector<16x32xf32>
    %c0_2 = arith.constant 0 : index
    %c0_3 = arith.constant 0 : index
    %2 = vector.load %arg2[%c0_2, %c0_3] : memref<1x32xf32, #tpu.memory_space<vmem>>, vector<1x32xf32>
    %c0_4 = arith.constant 0 : index
    %c0_5 = arith.constant 0 : index
    %3 = vector.load %arg3[%c0_4, %c0_5] : memref<1x32xf32, #tpu.memory_space<vmem>>, vector<1x32xf32>
    %cst = arith.constant dense<0.000000e+00> : vector<16xf32>
    %4 = vector.multi_reduction <add>, %1, %cst [1] : vector<16x32xf32> to vector<16xf32>
    %5 = vector.shape_cast %4 : vector<16xf32> to vector<16x1xf32>
    %cst_6 = arith.constant 3.200000e+01 : f32
    %6 = vector.broadcast %cst_6 : f32 to vector<16x1xf32>
    %7 = arith.divf %5, %6 : vector<16x1xf32>
    %8 = vector.broadcast %7 : vector<16x1xf32> to vector<16x32xf32>
    %9 = arith.subf %1, %8 : vector<16x32xf32>
    %10 = arith.mulf %9, %9 : vector<16x32xf32>
    %cst_7 = arith.constant dense<0.000000e+00> : vector<16xf32>
    %11 = vector.multi_reduction <add>, %10, %cst_7 [1] : vector<16x32xf32> to vector<16xf32>
    %12 = vector.shape_cast %11 : vector<16xf32> to vector<16x1xf32>
    %cst_8 = arith.constant 3.200000e+01 : f32
    %13 = vector.broadcast %cst_8 : f32 to vector<16x1xf32>
    %14 = arith.divf %12, %13 : vector<16x1xf32>
    %15 = vector.broadcast %7 : vector<16x1xf32> to vector<16x32xf32>
    %16 = arith.subf %1, %15 : vector<16x32xf32>
    %cst_9 = arith.constant 9.99999974E-6 : f32
    %17 = vector.broadcast %cst_9 : f32 to vector<16x1xf32>
    %18 = arith.addf %14, %17 : vector<16x1xf32>
    %19 = math.rsqrt %18 : vector<16x1xf32>
    %20 = vector.broadcast %19 : vector<16x1xf32> to vector<16x32xf32>
    %21 = arith.mulf %16, %20 : vector<16x32xf32>
    %22 = vector.broadcast %2 : vector<1x32xf32> to vector<16x32xf32>
    %23 = arith.mulf %21, %22 : vector<16x32xf32>
    %24 = vector.broadcast %3 : vector<1x32xf32> to vector<16x32xf32>
    %25 = arith.addf %23, %24 : vector<16x32xf32>
    %26 = arith.truncf %25 : vector<16x32xf32> to vector<16x32xbf16>
    %c0_10 = arith.constant 0 : index
    %c0_11 = arith.constant 0 : index
    %27 = vector.load %arg4[%c0_10, %c0_11] : memref<32x96xbf16, #tpu.memory_space<vmem>>, vector<32x96xbf16>
    %cst_12 = arith.constant dense<0.000000e+00> : vector<16x96xf32>
    %28 = tpu.matmul %26, %27, %cst_12 {dimension_numbers = #tpu.dot_dimension_numbers<[1], [0], [0], [1], [0, 0, 1, 1], [], []>} : vector<16x32xbf16>, vector<32x96xbf16>, vector<16x96xf32> -> vector<16x96xf32>
    %29 = vector.extract_strided_slice %28 {offsets = [0, 0], sizes = [16, 32], strides = [1, 1]} : vector<16x96xf32> to vector<16x32xf32>
    %30 = vector.extract_strided_slice %29 {offsets = [0, 0], sizes = [16, 16], strides = [1, 1]} : vector<16x32xf32> to vector<16x16xf32>
    %31 = vector.extract_strided_slice %29 {offsets = [0, 16], sizes = [16, 16], strides = [1, 1]} : vector<16x32xf32> to vector<16x16xf32>
    %32 = vector.shape_cast %30 : vector<16x16xf32> to vector<1x16x16xf32>
    %33 = vector.shape_cast %31 : vector<16x16xf32> to vector<1x16x16xf32>
    %34 = tpu.concatenate %32, %33 in 0 : vector<1x16x16xf32>, vector<1x16x16xf32> -> vector<2x16x16xf32>
    %35 = arith.truncf %34 : vector<2x16x16xf32> to vector<2x16x16xbf16>
    %36 = vector.extract_strided_slice %28 {offsets = [0, 32], sizes = [16, 32], strides = [1, 1]} : vector<16x96xf32> to vector<16x32xf32>
    %37 = vector.extract_strided_slice %36 {offsets = [0, 0], sizes = [16, 16], strides = [1, 1]} : vector<16x32xf32> to vector<16x16xf32>
    %38 = vector.extract_strided_slice %36 {offsets = [0, 16], sizes = [16, 16], strides = [1, 1]} : vector<16x32xf32> to vector<16x16xf32>
    %39 = vector.shape_cast %37 : vector<16x16xf32> to vector<1x16x16xf32>
    %40 = vector.shape_cast %38 : vector<16x16xf32> to vector<1x16x16xf32>
    %41 = tpu.concatenate %39, %40 in 0 : vector<1x16x16xf32>, vector<1x16x16xf32> -> vector<2x16x16xf32>
    %42 = arith.truncf %41 : vector<2x16x16xf32> to vector<2x16x16xbf16>
    %43 = vector.extract_strided_slice %28 {offsets = [0, 64], sizes = [16, 32], strides = [1, 1]} : vector<16x96xf32> to vector<16x32xf32>
    %44 = vector.extract_strided_slice %43 {offsets = [0, 0], sizes = [16, 16], strides = [1, 1]} : vector<16x32xf32> to vector<16x16xf32>
    %45 = vector.extract_strided_slice %43 {offsets = [0, 16], sizes = [16, 16], strides = [1, 1]} : vector<16x32xf32> to vector<16x16xf32>
    %46 = vector.shape_cast %44 : vector<16x16xf32> to vector<1x16x16xf32>
    %47 = vector.shape_cast %45 : vector<16x16xf32> to vector<1x16x16xf32>
    %48 = tpu.concatenate %46, %47 in 0 : vector<1x16x16xf32>, vector<1x16x16xf32> -> vector<2x16x16xf32>
    %49 = arith.truncf %48 : vector<2x16x16xf32> to vector<2x16x16xbf16>
    "tpu.trace_start"() <{level = 10 : i32, message = "hqd,hkd->hqk"}> : () -> ()
    %cst_13 = arith.constant dense<0.000000e+00> : vector<2x16x16xf32>
    %50 = tpu.matmul %35, %42, %cst_13 {dimension_numbers = #tpu.dot_dimension_numbers<[2], [2], [1], [1], [0, 0, 0, 1, 1, 1], [0], [0]>} : vector<2x16x16xbf16>, vector<2x16x16xbf16>, vector<2x16x16xf32> -> vector<2x16x16xf32>
    "tpu.trace_stop"() : () -> ()
    %51 = tpu.iota {dimensions = array<i32: 2>} : vector<2x16x16xi32>
    %c9_i32 = arith.constant 9 : i32
    %52 = vector.broadcast %c9_i32 : i32 to vector<2x16x16xi32>
    %53 = arith.cmpi slt, %51, %52 : vector<2x16x16xi32>
    %cst_14 = arith.constant -1.000000e+30 : f32
    %54 = vector.broadcast %cst_14 : f32 to vector<2x16x16xf32>
    %55 = arith.select %53, %50, %54 : vector<2x16x16xi1>, vector<2x16x16xf32>
    %cst_15 = arith.constant dense<0xFF800000> : vector<2x16xf32>
    %56 = vector.multi_reduction <maximumf>, %55, %cst_15 [2] : vector<2x16x16xf32> to vector<2x16xf32>
    %57 = vector.shape_cast %56 : vector<2x16xf32> to vector<2x16x1xf32>
    %58 = vector.broadcast %57 : vector<2x16x1xf32> to vector<2x16x16xf32>
    %59 = arith.subf %55, %58 : vector<2x16x16xf32>
    %60 = math.exp %59 : vector<2x16x16xf32>
    %cst_16 = arith.constant dense<0.000000e+00> : vector<2x16xf32>
    %61 = vector.multi_reduction <add>, %60, %cst_16 [2] : vector<2x16x16xf32> to vector<2x16xf32>
    %62 = vector.shape_cast %61 : vector<2x16xf32> to vector<2x16x1xf32>
    %63 = tpu.reciprocal %62 {approx = true} : vector<2x16x1xf32> -> vector<2x16x1xf32>
    %64 = vector.broadcast %63 : vector<2x16x1xf32> to vector<2x16x16xf32>
    %65 = arith.mulf %60, %64 : vector<2x16x16xf32>
    %66 = arith.truncf %65 : vector<2x16x16xf32> to vector<2x16x16xbf16>
    "tpu.trace_start"() <{level = 10 : i32, message = "hqk,hkd->hqd"}> : () -> ()
    %cst_17 = arith.constant dense<0.000000e+00> : vector<2x16x16xf32>
    %67 = tpu.matmul %66, %49, %cst_17 {dimension_numbers = #tpu.dot_dimension_numbers<[2], [1], [1], [2], [0, 0, 0, 1, 1, 2], [0], [0]>} : vector<2x16x16xbf16>, vector<2x16x16xbf16>, vector<2x16x16xf32> -> vector<2x16x16xf32>
    "tpu.trace_stop"() : () -> ()
    %68 = vector.extract_strided_slice %67 {offsets = [0, 0, 0], sizes = [1, 16, 16], strides = [1, 1, 1]} : vector<2x16x16xf32> to vector<1x16x16xf32>
    %69 = vector.shape_cast %68 : vector<1x16x16xf32> to vector<16x16xf32>
    %70 = vector.extract_strided_slice %67 {offsets = [1, 0, 0], sizes = [1, 16, 16], strides = [1, 1, 1]} : vector<2x16x16xf32> to vector<1x16x16xf32>
    %71 = vector.shape_cast %70 : vector<1x16x16xf32> to vector<16x16xf32>
    %72 = tpu.concatenate %69, %71 in 1 : vector<16x16xf32>, vector<16x16xf32> -> vector<16x32xf32>
    %73 = arith.truncf %72 : vector<16x32xf32> to vector<16x32xbf16>
    %c0_18 = arith.constant 0 : index
    %c0_19 = arith.constant 0 : index
    %74 = vector.load %arg5[%c0_18, %c0_19] : memref<32x32xbf16, #tpu.memory_space<vmem>>, vector<32x32xbf16>
    %cst_20 = arith.constant dense<0.000000e+00> : vector<16x32xf32>
    %75 = tpu.matmul %73, %74, %cst_20 {dimension_numbers = #tpu.dot_dimension_numbers<[1], [0], [0], [1], [0, 0, 1, 1], [], []>} : vector<16x32xbf16>, vector<32x32xbf16>, vector<16x32xf32> -> vector<16x32xf32>
    %76 = arith.addf %1, %75 : vector<16x32xf32>
    %c0_21 = arith.constant 0 : index
    %c0_22 = arith.constant 0 : index
    %77 = vector.load %arg6[%c0_21, %c0_22] : memref<1x32xf32, #tpu.memory_space<vmem>>, vector<1x32xf32>
    %78 = vector.broadcast %77 : vector<1x32xf32> to vector<16x32xf32>
    %79 = arith.addf %76, %78 : vector<16x32xf32>
    %c0_23 = arith.constant 0 : index
    %c0_24 = arith.constant 0 : index
    %80 = vector.load %arg7[%c0_23, %c0_24] : memref<1x32xf32, #tpu.memory_space<vmem>>, vector<1x32xf32>
    %c0_25 = arith.constant 0 : index
    %c0_26 = arith.constant 0 : index
    %81 = vector.load %arg8[%c0_25, %c0_26] : memref<1x32xf32, #tpu.memory_space<vmem>>, vector<1x32xf32>
    %cst_27 = arith.constant dense<0.000000e+00> : vector<16xf32>
    %82 = vector.multi_reduction <add>, %79, %cst_27 [1] : vector<16x32xf32> to vector<16xf32>
    %83 = vector.shape_cast %82 : vector<16xf32> to vector<16x1xf32>
    %cst_28 = arith.constant 3.200000e+01 : f32
    %84 = vector.broadcast %cst_28 : f32 to vector<16x1xf32>
    %85 = arith.divf %83, %84 : vector<16x1xf32>
    %86 = vector.broadcast %85 : vector<16x1xf32> to vector<16x32xf32>
    %87 = arith.subf %79, %86 : vector<16x32xf32>
    %88 = arith.mulf %87, %87 : vector<16x32xf32>
    %cst_29 = arith.constant dense<0.000000e+00> : vector<16xf32>
    %89 = vector.multi_reduction <add>, %88, %cst_29 [1] : vector<16x32xf32> to vector<16xf32>
    %90 = vector.shape_cast %89 : vector<16xf32> to vector<16x1xf32>
    %cst_30 = arith.constant 3.200000e+01 : f32
    %91 = vector.broadcast %cst_30 : f32 to vector<16x1xf32>
    %92 = arith.divf %90, %91 : vector<16x1xf32>
    %93 = vector.broadcast %85 : vector<16x1xf32> to vector<16x32xf32>
    %94 = arith.subf %79, %93 : vector<16x32xf32>
    %cst_31 = arith.constant 9.99999974E-6 : f32
    %95 = vector.broadcast %cst_31 : f32 to vector<16x1xf32>
    %96 = arith.addf %92, %95 : vector<16x1xf32>
    %97 = math.rsqrt %96 : vector<16x1xf32>
    %98 = vector.broadcast %97 : vector<16x1xf32> to vector<16x32xf32>
    %99 = arith.mulf %94, %98 : vector<16x32xf32>
    %100 = vector.broadcast %80 : vector<1x32xf32> to vector<16x32xf32>
    %101 = arith.mulf %99, %100 : vector<16x32xf32>
    %102 = vector.broadcast %81 : vector<1x32xf32> to vector<16x32xf32>
    %103 = arith.addf %101, %102 : vector<16x32xf32>
    %104 = arith.truncf %103 : vector<16x32xf32> to vector<16x32xbf16>
    %c0_32 = arith.constant 0 : index
    %c0_33 = arith.constant 0 : index
    %105 = vector.load %arg9[%c0_32, %c0_33] : memref<32x64xbf16, #tpu.memory_space<vmem>>, vector<32x64xbf16>
    %cst_34 = arith.constant dense<0.000000e+00> : vector<16x64xf32>
    %106 = tpu.matmul %104, %105, %cst_34 {dimension_numbers = #tpu.dot_dimension_numbers<[1], [0], [0], [1], [0, 0, 1, 1], [], []>} : vector<16x32xbf16>, vector<32x64xbf16>, vector<16x64xf32> -> vector<16x64xf32>
    %c0_35 = arith.constant 0 : index
    %c0_36 = arith.constant 0 : index
    %107 = vector.load %arg10[%c0_35, %c0_36] : memref<1x64xf32, #tpu.memory_space<vmem>>, vector<1x64xf32>
    %108 = vector.broadcast %107 : vector<1x64xf32> to vector<16x64xf32>
    %109 = arith.addf %106, %108 : vector<16x64xf32>
    %cst_37 = arith.constant 5.000000e-01 : f32
    %110 = vector.broadcast %cst_37 : f32 to vector<16x64xf32>
    %111 = arith.mulf %110, %109 : vector<16x64xf32>
    %cst_38 = arith.constant 0.707106769 : f32
    %112 = vector.broadcast %cst_38 : f32 to vector<16x64xf32>
    %113 = arith.mulf %109, %112 : vector<16x64xf32>
    %cst_39 = arith.constant 0.000000e+00 : f32
    %114 = vector.broadcast %cst_39 : f32 to vector<16x64xf32>
    %115 = arith.cmpf oge, %113, %114 : vector<16x64xf32>
    %cst_40 = arith.constant 1.000000e+00 : f32
    %cst_41 = arith.constant -1.000000e+00 : f32
    %116 = vector.broadcast %cst_40 : f32 to vector<16x64xf32>
    %117 = vector.broadcast %cst_41 : f32 to vector<16x64xf32>
    %118 = arith.select %115, %116, %117 : vector<16x64xi1>, vector<16x64xf32>
    %119 = math.absf %113 : vector<16x64xf32>
    %cst_42 = arith.constant 0.327591091 : f32
    %120 = vector.broadcast %cst_42 : f32 to vector<16x64xf32>
    %121 = arith.mulf %120, %119 : vector<16x64xf32>
    %cst_43 = arith.constant 1.000000e+00 : f32
    %122 = vector.broadcast %cst_43 : f32 to vector<16x64xf32>
    %123 = arith.addf %122, %121 : vector<16x64xf32>
    %cst_44 = arith.constant 1.000000e+00 : f32
    %124 = vector.broadcast %cst_44 : f32 to vector<16x64xf32>
    %125 = arith.divf %124, %123 : vector<16x64xf32>
    %cst_45 = arith.constant 1.06140542 : f32
    %126 = vector.broadcast %cst_45 : f32 to vector<16x64xf32>
    %127 = arith.mulf %126, %125 : vector<16x64xf32>
    %cst_46 = arith.constant -1.45315206 : f32
    %128 = vector.broadcast %cst_46 : f32 to vector<16x64xf32>
    %129 = arith.addf %127, %128 : vector<16x64xf32>
    %130 = arith.mulf %129, %125 : vector<16x64xf32>
    %cst_47 = arith.constant 1.42141378 : f32
    %131 = vector.broadcast %cst_47 : f32 to vector<16x64xf32>
    %132 = arith.addf %130, %131 : vector<16x64xf32>
    %133 = arith.mulf %132, %125 : vector<16x64xf32>
    %cst_48 = arith.constant -0.284496725 : f32
    %134 = vector.broadcast %cst_48 : f32 to vector<16x64xf32>
    %135 = arith.addf %133, %134 : vector<16x64xf32>
    %136 = arith.mulf %135, %125 : vector<16x64xf32>
    %cst_49 = arith.constant 0.254829586 : f32
    %137 = vector.broadcast %cst_49 : f32 to vector<16x64xf32>
    %138 = arith.addf %136, %137 : vector<16x64xf32>
    %139 = arith.mulf %138, %125 : vector<16x64xf32>
    %cst_50 = arith.constant 0.000000e+00 : f32
    %140 = vector.broadcast %cst_50 : f32 to vector<16x64xf32>
    %141 = arith.subf %140, %119 : vector<16x64xf32>
    %142 = arith.mulf %141, %119 : vector<16x64xf32>
    %143 = math.exp %142 : vector<16x64xf32>
    %144 = arith.mulf %139, %143 : vector<16x64xf32>
    %cst_51 = arith.constant 1.000000e+00 : f32
    %145 = vector.broadcast %cst_51 : f32 to vector<16x64xf32>
    %146 = arith.subf %145, %144 : vector<16x64xf32>
    %147 = arith.mulf %118, %146 : vector<16x64xf32>
    %cst_52 = arith.constant 1.000000e+00 : f32
    %148 = vector.broadcast %cst_52 : f32 to vector<16x64xf32>
    %149 = arith.addf %148, %147 : vector<16x64xf32>
    %150 = arith.mulf %111, %149 : vector<16x64xf32>
    %151 = arith.truncf %150 : vector<16x64xf32> to vector<16x64xbf16>
    %c0_53 = arith.constant 0 : index
    %c0_54 = arith.constant 0 : index
    %152 = vector.load %arg11[%c0_53, %c0_54] : memref<64x32xbf16, #tpu.memory_space<vmem>>, vector<64x32xbf16>
    %cst_55 = arith.constant dense<0.000000e+00> : vector<16x32xf32>
    %153 = tpu.matmul %151, %152, %cst_55 {dimension_numbers = #tpu.dot_dimension_numbers<[1], [0], [0], [1], [0, 0, 1, 1], [], []>} : vector<16x64xbf16>, vector<64x32xbf16>, vector<16x32xf32> -> vector<16x32xf32>
    %c0_56 = arith.constant 0 : index
    %c0_57 = arith.constant 0 : index
    %154 = vector.load %arg12[%c0_56, %c0_57] : memref<1x32xf32, #tpu.memory_space<vmem>>, vector<1x32xf32>
    %155 = vector.broadcast %154 : vector<1x32xf32> to vector<16x32xf32>
    %156 = arith.addf %153, %155 : vector<16x32xf32>
    %157 = arith.addf %79, %156 : vector<16x32xf32>
    %c0_58 = arith.constant 0 : index
    %c0_59 = arith.constant 0 : index
    %c0_60 = arith.constant 0 : index
    %158 = vector.load %arg13[%c0_58, %c0_59, %c0_60] : memref<1x16x32xf32, #tpu.memory_space<vmem>>, vector<1x16x32xf32>
    %159 = vector.shape_cast %158 : vector<1x16x32xf32> to vector<16x32xf32>
    %160 = vector.shape_cast %157 : vector<16x32xf32> to vector<1x16x32xf32>
    tpu.vector_store %arg13[%c0_58, %c0_59, %c0_60], %160 {strides = array<i32>} : memref<1x16x32xf32, #tpu.memory_space<vmem>>, vector<1x16x32xf32>,
    return
  }
  func.func @transform_0(%arg0: i32) -> (i32, i32, i32) {
    %c0_i32 = arith.constant 0 : i32
    %c0_i32_0 = arith.constant 0 : i32
    %c0_i32_1 = arith.constant 0 : i32
    return %arg0, %c0_i32, %c0_i32_0 : i32, i32, i32
  }
  func.func @transform_1(%arg0: i32) -> (i32, i32) {
    %c0_i32 = arith.constant 0 : i32
    %c0_i32_0 = arith.constant 0 : i32
    %c0_i32_1 = arith.constant 0 : i32
    return %c0_i32, %c0_i32_0 : i32, i32
  }
  func.func @transform_2(%arg0: i32) -> (i32, i32) {
    %c0_i32 = arith.constant 0 : i32
    %c0_i32_0 = arith.constant 0 : i32
    %c0_i32_1 = arith.constant 0 : i32
    return %c0_i32, %c0_i32_0 : i32, i32
  }
  func.func @transform_3(%arg0: i32) -> (i32, i32) {
    %c0_i32 = arith.constant 0 : i32
    %c0_i32_0 = arith.constant 0 : i32
    %c0_i32_1 = arith.constant 0 : i32
    return %c0_i32, %c0_i32_0 : i32, i32
  }
  func.func @transform_4(%arg0: i32) -> (i32, i32) {
    %c0_i32 = arith.constant 0 : i32
    %c0_i32_0 = arith.constant 0 : i32
    %c0_i32_1 = arith.constant 0 : i32
    return %c0_i32, %c0_i32_0 : i32, i32
  }
  func.func @transform_5(%arg0: i32) -> (i32, i32) {
    %c0_i32 = arith.constant 0 : i32
    %c0_i32_0 = arith.constant 0 : i32
    %c0_i32_1 = arith.constant 0 : i32
    return %c0_i32, %c0_i32_0 : i32, i32
  }
  func.func @transform_6(%arg0: i32) -> (i32, i32) {
    %c0_i32 = arith.constant 0 : i32
    %c0_i32_0 = arith.constant 0 : i32
    %c0_i32_1 = arith.constant 0 : i32
    return %c0_i32, %c0_i32_0 : i32, i32
  }
  func.func @transform_7(%arg0: i32) -> (i32, i32) {
    %c0_i32 = arith.constant 0 : i32
    %c0_i32_0 = arith.constant 0 : i32
    %c0_i32_1 = arith.constant 0 : i32
    return %c0_i32, %c0_i32_0 : i32, i32
  }
  func.func @transform_8(%arg0: i32) -> (i32, i32) {
    %c0_i32 = arith.constant 0 : i32
    %c0_i32_0 = arith.constant 0 : i32
    %c0_i32_1 = arith.constant 0 : i32
    return %c0_i32, %c0_i32_0 : i32, i32
  }
  func.func @transform_9(%arg0: i32) -> (i32, i32) {
    %c0_i32 = arith.constant 0 : i32
    %c0_i32_0 = arith.constant 0 : i32
    %c0_i32_1 = arith.constant 0 : i32
    return %c0_i32, %c0_i32_0 : i32, i32
  }
  func.func @transform_10(%arg0: i32) -> (i32, i32) {
    %c0_i32 = arith.constant 0 : i32
    %c0_i32_0 = arith.constant 0 : i32
    %c0_i32_1 = arith.constant 0 : i32
    return %c0_i32, %c0_i32_0 : i32, i32
  }
  func.func @transform_11(%arg0: i32) -> (i32, i32) {
    %c0_i32 = arith.constant 0 : i32
    %c0_i32_0 = arith.constant 0 : i32
    %c0_i32_1 = arith.constant 0 : i32
    return %c0_i32, %c0_i32_0 : i32, i32
  }
  func.func @transform_12(%arg0: i32) -> (i32, i32, i32) {
    %c0_i32 = arith.constant 0 : i32
    %c0_i32_0 = arith.constant 0 : i32
    %c0_i32_1 = arith.constant 0 : i32
    return %arg0, %c0_i32, %c0_i32_0 : i32, i32, i32
  }
}

</mosaic_0001>

<llo_original>
// kernel: transformer_encoder_3d.3
$region0: #{transformer_encoder_3d.3}
  #allocation0 [shape = 'u32[]', space=smem, size = 0x4, offset = 0x4, fixed_abs, tag = 'smem constant byte address 0x4 - core index']
  #allocation1 [shape = 'u32[144,128]{1,0:T(1,128)}', space=vmem, size = 0x12000, scoped, tag = 'internal scratch']
  %s0 = inlined_call_operand.vmem [shape: f32[2,8,192], index: 0, kind: input, shape index: {}]
  %s1 = inlined_call_operand.vmem [shape: f32[1,192], index: 1, kind: input, shape index: {}]
  %s2 = inlined_call_operand.vmem [shape: f32[1,192], index: 2, kind: input, shape index: {}]
  %s3 = inlined_call_operand.vmem [shape: bf16[192,32], index: 3, kind: input, shape index: {}]
  %s4 = inlined_call_operand.vmem [shape: f32[1,32], index: 4, kind: input, shape index: {}]
  %s5 = inlined_call_operand.vmem [shape: f32[1,32], index: 5, kind: input, shape index: {}]
  %s6 = inlined_call_operand.vmem [shape: f32[1,32], index: 6, kind: input, shape index: {}]
  %s7 = inlined_call_operand.vmem [shape: f32[2,8,32], index: 7, kind: output, shape index: {}]
  %s8 = sld [smem:[#allocation0]]
  $region61: #{transformer_encoder_3d.3} parent=0
    _
  %s10 = ssub.s32 1, %s8
  %s11 = scalar_select 0, %s10, %s8
  loop: start=0, step=1, limit=4
  $region2: #{transformer_encoder_3d.3} parent=0 // loop_pre_header
    _
  $region3: #{transformer_encoder_3d.3} parent=0 // loop_header
    %s13 = sphi 0, %s17
    %p14 = scmp.ge.s32.totalorder %s13, 4
    %s23 = sphi 0, %s25
    %s26 = sphi 0, %s23
    %s27 = sphi 0, %s26
    %s43 = sphi 0, %s27
    %s47 = sphi 0, %s47
    %s49 = sphi 0, %s47
    %s50 = sphi 0, %s49
    %s64 = sphi 0, %s50
    %s68 = sphi 0, %s68
    %s70 = sphi 0, %s68
    %s71 = sphi 0, %s70
    %s85 = sphi 0, %s71
    %s89 = sphi 0, %s89
    %s91 = sphi 0, %s89
    %s92 = sphi 0, %s91
    %s106 = sphi 0, %s92
    %s110 = sphi 0, %s110
    %s112 = sphi 0, %s110
    %s113 = sphi 0, %s112
    %s127 = sphi 0, %s113
    %s131 = sphi 0, %s131
    %s133 = sphi 0, %s131
    %s134 = sphi 0, %s133
    %s148 = sphi 0, %s134
    %s152 = sphi 0, %s152
    %s154 = sphi 0, %s152
    %s155 = sphi 0, %s154
    %s169 = sphi 0, %s155
    %s175 = sphi 0, %s177
    %s178 = sphi 0, %s175
    %s179 = sphi 0, %s178
    %s195 = sphi 0, %s179
  $region4: #{transformer_encoder_3d.3} parent=0 // loop_header_branch
    %16 = sbr.rel (%p14) target = $region8
  $region5: #{transformer_encoder_3d.3} parent=0 // loop_body
    %s18 = ssub.s32 %s13, 1
    %s19 = ssub.s32 %s13, 2
    %s20 = sadd.s32 %s13, 1
    %s21 = ssub.s32 %s13, %s20
    %p22 = scmp.eq.s32.totalorder %s21, 0
    %s24 = sadd.s32 %s23, 1
    %s25 = scalar_select %p22, %s23, %s24
    %p28 = pneg %p22
    %p29 = scmp.eq.s32.totalorder %s13, 1
    %p30 = por %p28, %p29
    %p31 = scmp.ne.s32.totalorder %s23, %s26
    %p32 = scmp.eq.s32.totalorder %s13, 0
    %p33 = por %p31, %p32
    %p34 = scmp.ne.s32.totalorder %s23, %s26
    %p35 = scmp.eq.s32.totalorder %s18, 1
    %p36 = por %p34, %p35
    %p37 = scmp.ne.s32.totalorder %s26, %s27
    %p38 = scmp.eq.s32.totalorder %s18, 0
    %p39 = por %p37, %p38
    %p40 = scmp.ne.s32.totalorder %s26, %s27
    %p41 = scmp.eq.s32.totalorder %s19, 1
    %p42 = por %p40, %p41
    %p44 = scmp.ne.s32.totalorder %s27, %s43
    %p45 = scmp.eq.s32.totalorder %s19, 0
    %p46 = por %p44, %p45
    %s48 = sadd.s32 %s47, 1
    %p51 = scmp.eq.s32.totalorder %s13, 1
    %p52 = scmp.ne.s32.totalorder %s47, %s49
    %p53 = scmp.eq.s32.totalorder %s13, 0
    %p54 = por %p52, %p53
    %p55 = scmp.ne.s32.totalorder %s47, %s49
    %p56 = scmp.eq.s32.totalorder %s18, 1
    %p57 = por %p55, %p56
    %p58 = scmp.ne.s32.totalorder %s49, %s50
    %p59 = scmp.eq.s32.totalorder %s18, 0
    %p60 = por %p58, %p59
    %p61 = scmp.ne.s32.totalorder %s49, %s50
    %p62 = scmp.eq.s32.totalorder %s19, 1
    %p63 = por %p61, %p62
    %p65 = scmp.ne.s32.totalorder %s50, %s64
    %p66 = scmp.eq.s32.totalorder %s19, 0
    %p67 = por %p65, %p66
    %s69 = sadd.s32 %s68, 1
    %p72 = scmp.eq.s32.totalorder %s13, 1
    %p73 = scmp.ne.s32.totalorder %s68, %s70
    %p74 = scmp.eq.s32.totalorder %s13, 0
    %p75 = por %p73, %p74
    %p76 = scmp.ne.s32.totalorder %s68, %s70
    %p77 = scmp.eq.s32.totalorder %s18, 1
    %p78 = por %p76, %p77
    %p79 = scmp.ne.s32.totalorder %s70, %s71
    %p80 = scmp.eq.s32.totalorder %s18, 0
    %p81 = por %p79, %p80
    %p82 = scmp.ne.s32.totalorder %s70, %s71
    %p83 = scmp.eq.s32.totalorder %s19, 1
    %p84 = por %p82, %p83
    %p86 = scmp.ne.s32.totalorder %s71, %s85
    %p87 = scmp.eq.s32.totalorder %s19, 0
    %p88 = por %p86, %p87
    %s90 = sadd.s32 %s89, 1
    %p93 = scmp.eq.s32.totalorder %s13, 1
    %p94 = scmp.ne.s32.totalorder %s89, %s91
    %p95 = scmp.eq.s32.totalorder %s13, 0
    %p96 = por %p94, %p95
    %p97 = scmp.ne.s32.totalorder %s89, %s91
    %p98 = scmp.eq.s32.totalorder %s18, 1
    %p99 = por %p97, %p98
    %p100 = scmp.ne.s32.totalorder %s91, %s92
    %p101 = scmp.eq.s32.totalorder %s18, 0
    %p102 = por %p100, %p101
    %p103 = scmp.ne.s32.totalorder %s91, %s92
    %p104 = scmp.eq.s32.totalorder %s19, 1
    %p105 = por %p103, %p104
    %p107 = scmp.ne.s32.totalorder %s92, %s106
    %p108 = scmp.eq.s32.totalorder %s19, 0
    %p109 = por %p107, %p108
    %s111 = sadd.s32 %s110, 1
    %p114 = scmp.eq.s32.totalorder %s13, 1
    %p115 = scmp.ne.s32.totalorder %s110, %s112
    %p116 = scmp.eq.s32.totalorder %s13, 0
    %p117 = por %p115, %p116
    %p118 = scmp.ne.s32.totalorder %s110, %s112
    %p119 = scmp.eq.s32.totalorder %s18, 1
    %p120 = por %p118, %p119
    %p121 = scmp.ne.s32.totalorder %s112, %s113
    %p122 = scmp.eq.s32.totalorder %s18, 0
    %p123 = por %p121, %p122
    %p124 = scmp.ne.s32.totalorder %s112, %s113
    %p125 = scmp.eq.s32.totalorder %s19, 1
    %p126 = por %p124, %p125
    %p128 = scmp.ne.s32.totalorder %s113, %s127
    %p129 = scmp.eq.s32.totalorder %s19, 0
    %p130 = por %p128, %p129
    %s132 = sadd.s32 %s131, 1
    %p135 = scmp.eq.s32.totalorder %s13, 1
    %p136 = scmp.ne.s32.totalorder %s131, %s133
    %p137 = scmp.eq.s32.totalorder %s13, 0
    %p138 = por %p136, %p137
    %p139 = scmp.ne.s32.totalorder %s131, %s133
    %p140 = scmp.eq.s32.totalorder %s18, 1
    %p141 = por %p139, %p140
    %p142 = scmp.ne.s32.totalorder %s133, %s134
    %p143 = scmp.eq.s32.totalorder %s18, 0
    %p144 = por %p142, %p143
    %p145 = scmp.ne.s32.totalorder %s133, %s134
    %p146 = scmp.eq.s32.totalorder %s19, 1
    %p147 = por %p145, %p146
    %p149 = scmp.ne.s32.totalorder %s134, %s148
    %p150 = scmp.eq.s32.totalorder %s19, 0
    %p151 = por %p149, %p150
    %s153 = sadd.s32 %s152, 1
    %p156 = scmp.eq.s32.totalorder %s13, 1
    %p157 = scmp.ne.s32.totalorder %s152, %s154
    %p158 = scmp.eq.s32.totalorder %s13, 0
    %p159 = por %p157, %p158
    %p160 = scmp.ne.s32.totalorder %s152, %s154
    %p161 = scmp.eq.s32.totalorder %s18, 1
    %p162 = por %p160, %p161
    %p163 = scmp.ne.s32.totalorder %s154, %s155
    %p164 = scmp.eq.s32.totalorder %s18, 0
    %p165 = por %p163, %p164
    %p166 = scmp.ne.s32.totalorder %s154, %s155
    %p167 = scmp.eq.s32.totalorder %s19, 1
    %p168 = por %p166, %p167
    %p170 = scmp.ne.s32.totalorder %s155, %s169
    %p171 = scmp.eq.s32.totalorder %s19, 0
    %p172 = por %p170, %p171
    %s173 = ssub.s32 %s13, %s20
    %p174 = scmp.eq.s32.totalorder %s173, 0
    %s176 = sadd.s32 %s175, 1
    %s177 = scalar_select %p174, %s175, %s176
    %p180 = pneg %p174
    %p181 = scmp.eq.s32.totalorder %s13, 1
    %p182 = por %p180, %p181
    %p183 = scmp.ne.s32.totalorder %s175, %s178
    %p184 = scmp.eq.s32.totalorder %s13, 0
    %p185 = por %p183, %p184
    %p186 = scmp.ne.s32.totalorder %s175, %s178
    %p187 = scmp.eq.s32.totalorder %s18, 1
    %p188 = por %p186, %p187
    %p189 = scmp.ne.s32.totalorder %s178, %s179
    %p190 = scmp.eq.s32.totalorder %s18, 0
    %p191 = por %p189, %p190
    %p192 = scmp.ne.s32.totalorder %s178, %s179
    %p193 = scmp.eq.s32.totalorder %s19, 1
    %p194 = por %p192, %p193
    %p196 = scmp.ne.s32.totalorder %s179, %s195
    %p197 = scmp.eq.s32.totalorder %s19, 0
    %p198 = por %p196, %p197
    %p199 = scmp.le.s32.totalorder 1, %s13
    %p200 = scmp.lt.s32.totalorder %s13, 3
    %p201 = pnand %p199, %p200
    %p202 = pneg %p201
    // Predicated region
    $region9: #{transformer_encoder_3d.3} parent=5 // pred_check
      _
    $region10: #{transformer_encoder_3d.3} parent=5 // pred_check_branch
      %204 = sbr.rel (%p201) target = $region12
    $region11: #{transformer_encoder_3d.3} parent=5 // pred_region
      %s205 = ssub.s32 %s13, 1
      // Predicated region
      $region13: #{transformer_encoder_3d.3} parent=11 // pred_check
        %p206 = pneg %p60
      $region14: #{transformer_encoder_3d.3} parent=11 // pred_check_branch
        %208 = sbr.rel (%p206) target = $region16
      $region15: #{transformer_encoder_3d.3} parent=11 // pred_region
        _
      $region16: #{transformer_encoder_3d.3} parent=11 // pred_fallthru
        _
      // Predicated region
      $region17: #{transformer_encoder_3d.3} parent=11 // pred_check
        %p209 = pneg %p81
      $region18: #{transformer_encoder_3d.3} parent=11 // pred_check_branch
        %211 = sbr.rel (%p209) target = $region20
      $region19: #{transformer_encoder_3d.3} parent=11 // pred_region
        _
      $region20: #{transformer_encoder_3d.3} parent=11 // pred_fallthru
        _
      // Predicated region
      $region21: #{transformer_encoder_3d.3} parent=11 // pred_check
        %p212 = pneg %p102
      $region22: #{transformer_encoder_3d.3} parent=11 // pred_check_branch
        %214 = sbr.rel (%p212) target = $region24
      $region23: #{transformer_encoder_3d.3} parent=11 // pred_region
        _
      $region24: #{transformer_encoder_3d.3} parent=11 // pred_fallthru
        _
      // Predicated region
      $region25: #{transformer_encoder_3d.3} parent=11 // pred_check
        %p215 = pneg %p123
      $region26: #{transformer_encoder_3d.3} parent=11 // pred_check_branch
        %217 = sbr.rel (%p215) target = $region28
      $region27: #{transformer_encoder_3d.3} parent=11 // pred_region
        _
      $region28: #{transformer_encoder_3d.3} parent=11 // pred_fallthru
        _
      // Predicated region
      $region29: #{transformer_encoder_3d.3} parent=11 // pred_check
        %p218 = pneg %p144
      $region30: #{transformer_encoder_3d.3} parent=11 // pred_check_branch
        %220 = sbr.rel (%p218) target = $region32
      $region31: #{transformer_encoder_3d.3} parent=11 // pred_region
        _
      $region32: #{transformer_encoder_3d.3} parent=11 // pred_fallthru
        _
      // Predicated region
      $region33: #{transformer_encoder_3d.3} parent=11 // pred_check
        %p221 = pneg %p165
      $region34: #{transformer_encoder_3d.3} parent=11 // pred_check_branch
        %223 = sbr.rel (%p221) target = $region36
      $region35: #{transformer_encoder_3d.3} parent=11 // pred_region
        _
      $region36: #{transformer_encoder_3d.3} parent=11 // pred_fallthru
        _
    $region12: #{transformer_encoder_3d.3} parent=5 // pred_fallthru
      _
    %p224 = scmp.lt.s32.totalorder %s13, 2
    // Predicated region
    $region37: #{transformer_encoder_3d.3} parent=5 // pred_check
      %p225 = pneg %p224
    $region38: #{transformer_encoder_3d.3} parent=5 // pred_check_branch
      %227 = sbr.rel (%p225) target = $region40
    $region39: #{transformer_encoder_3d.3} parent=5 // pred_region
      // Predicated region
      $region41: #{transformer_encoder_3d.3} parent=39 // pred_check
        %p228 = pneg %p33
      $region42: #{transformer_encoder_3d.3} parent=39 // pred_check_branch
        %230 = sbr.rel (%p228) target = $region44
      $region43: #{transformer_encoder_3d.3} parent=39 // pred_region
        %p231 = scmp.lt.s32.totalorder %s13, 1
        %s232 = scalar_select %p231, %s13, 1
        %s233 = smul.addr %s232, 2
        %s234 = smul.addr %s233, 8
        %s235 = scalar_lea.vmem %s0, %s234
      $region44: #{transformer_encoder_3d.3} parent=39 // pred_fallthru
        _
    $region40: #{transformer_encoder_3d.3} parent=5 // pred_fallthru
      _
    %p236 = scmp.le.s32.totalorder 1, %s13
    %p237 = scmp.lt.s32.totalorder %s13, 3
    %p238 = pnand %p236, %p237
    %p239 = pneg %p238
    // Predicated region
    $region45: #{transformer_encoder_3d.3} parent=5 // pred_check
      _
    $region46: #{transformer_encoder_3d.3} parent=5 // pred_check_branch
      %241 = sbr.rel (%p238) target = $region48
    $region47: #{transformer_encoder_3d.3} parent=5 // pred_region
      %s242 = ssub.s32 %s13, 1
      %p243 = scmp.lt.s32.totalorder %s18, 1
      %s244 = scalar_select %p243, %s18, 1
      %s245 = smul.addr %s244, 2
      %s246 = smul.addr %s245, 8
      %s247 = scalar_lea.vmem %s0, %s246
      %p248 = pneg %p39
      %p249 = pneg %p36
      %p250 = pneg %p60
      %p251 = pneg %p57
      %p252 = pneg %p81
      %p253 = pneg %p78
      %p254 = pneg %p102
      %p255 = pneg %p99
      %p256 = pneg %p123
      %p257 = pneg %p120
      %p258 = pneg %p144
      %p259 = pneg %p141
      %p260 = pneg %p165
      %p261 = pneg %p162
      %p262 = pneg %p191
      %p263 = pneg %p188
      %p264 = scmp.lt.s32.totalorder %s18, 1
      %s265 = scalar_select %p264, %s18, 1
      %s266 = smul.addr %s265, 8
      %s267 = scalar_lea.vmem %s7, %s266
      %p268 = scmp.lt.s32.totalorder %s18, 1
      %s269 = scalar_select %p268, %s18, 1
      %s270 = smul.addr %s269, 2
      %s271 = smul.addr %s270, 8
      %s272 = scalar_lea.vmem %s0, %s271
      %p273 = scmp.lt.s32.totalorder %s18, 1
      %s274 = scalar_select %p273, %s18, 1
      %s275 = smul.addr %s274, 8
      %s276 = scalar_lea.vmem %s7, %s275
      %v278 = vld [vmem:[%s272] sm:$0xff]
      %v279 = vld [vmem:[%s272 + $0x8] sm:$0xff]
      %v280 = vld [vmem:[%s1] sm:$0x3]
      %v281 = vld [vmem:[%s2] sm:$0x3]
      %vm282 = vcmask 523264
      %v283 = vsel %vm282, %v279, 0.0
      %v284 = vadd.f32 %v278, %v283
      %285 = vadd.xlane.f32.xlu0 %v284
      %v286 = vpop.xlane.xlu0 %285
      %v287 = vrcp.pop 192.0
      %v288 = vmul.f32 %v286, %v287
      %v289 = vsub.f32 %v278, %v288
      %v290 = vsub.f32 %v279, %v288
      %v291 = vmul.f32 %v289, %v289
      %v292 = vmul.f32 %v290, %v290
      %v293 = vsel %vm282, %v292, 0.0
      %v294 = vadd.f32 %v291, %v293
      %295 = vadd.xlane.f32.xlu0 %v294
      %v296 = vpop.xlane.xlu0 %295
      %v297 = vmul.f32 %v296, %v287
      %v298 = vadd.f32 %v297, 1e-05
      %v299 = vrsqrt.pop %v298
      %v300 = vmul.f32 %v289, %v299
      %v301 = vmul.f32 %v290, %v299
      %v303 = vlaneseq
      %v304 = vshrl.u32 %v303, 7
      %v305 = vsub.s32 0, %v304
      %v306 = vrot.slane %v280, %v305
      %v307 = vlaneseq
      %v308 = vshrl.u32 %v307, 7
      %v309 = vsub.s32 1, %v308
      %v310 = vrot.slane %v280, %v309
      %v313 = vmul.f32 %v300, %v306
      %v314 = vmul.f32 %v301, %v310
      %v316 = vlaneseq
      %v317 = vshrl.u32 %v316, 7
      %v318 = vsub.s32 0, %v317
      %v319 = vrot.slane %v281, %v318
      %v320 = vlaneseq
      %v321 = vshrl.u32 %v320, 7
      %v322 = vsub.s32 1, %v321
      %v323 = vrot.slane %v281, %v322
      %v326 = vadd.f32 %v313, %v319
      %v327 = vadd.f32 %v314, %v323
      %v328 = vpack.c.bf16 %v326, %v326
      %v329 = vpack.c.bf16 %v327, %v327
      %v330 = vld [vmem:[%s3] sm:$0xf]
      %v331 = vld [vmem:[%s3 + $0x4] sm:$0xf]
      %v332 = vld [vmem:[%s3 + $0x8] sm:$0xf]
      %v333 = vld [vmem:[%s3 + $0xc] sm:$0xf]
      %v334 = vld [vmem:[%s3 + $0x10] sm:$0xf]
      %v335 = vld [vmem:[%s3 + $0x14] sm:$0xf]
      %v336 = vld [vmem:[%s3 + $0x18] sm:$0xf]
      %v337 = vld [vmem:[%s3 + $0x1c] sm:$0xf]
      %v338 = vld [vmem:[%s3 + $0x20] sm:$0xf]
      %v339 = vld [vmem:[%s3 + $0x24] sm:$0xf]
      %v340 = vld [vmem:[%s3 + $0x28] sm:$0xf]
      %v341 = vld [vmem:[%s3 + $0x2c] sm:$0xf]
      %v342 = vld [vmem:[%s3 + $0x30] sm:$0xf]
      %v343 = vld [vmem:[%s3 + $0x34] sm:$0xf]
      %v344 = vld [vmem:[%s3 + $0x38] sm:$0xf]
      %v345 = vld [vmem:[%s3 + $0x3c] sm:$0xf]
      %v346 = vld [vmem:[%s3 + $0x40] sm:$0xf]
      %v347 = vld [vmem:[%s3 + $0x44] sm:$0xf]
      %v348 = vld [vmem:[%s3 + $0x48] sm:$0xf]
      %v349 = vld [vmem:[%s3 + $0x4c] sm:$0xf]
      %v350 = vld [vmem:[%s3 + $0x50] sm:$0xf]
      %v351 = vld [vmem:[%s3 + $0x54] sm:$0xf]
      %v352 = vld [vmem:[%s3 + $0x58] sm:$0xf]
      %v353 = vld [vmem:[%s3 + $0x5c] sm:$0xf]
      %v354 = vld [vmem:[%s4] sm:$0x1]
      %v356 = vlaneseq
      %v357 = vshrl.u32 %v356, 7
      %v358 = vsub.s32 0, %v357
      %v359 = vrot.slane %v354, %v358
      %v385 = vunpack.c.l.b16 %v330
      %v386 = vunpack.c.l.b16 %v331
      %v387 = vunpack.c.l.b16 %v332
      %v388 = vunpack.c.l.b16 %v333
      %v389 = vunpack.c.l.b16 %v334
      %v390 = vunpack.c.l.b16 %v335
      %v391 = vunpack.c.l.b16 %v336
      %v392 = vunpack.c.l.b16 %v337
      %v393 = vunpack.c.l.b16 %v338
      %v394 = vunpack.c.l.b16 %v339
      %v395 = vunpack.c.l.b16 %v340
      %v396 = vunpack.c.l.b16 %v341
      %v397 = vunpack.c.l.b16 %v342
      %v398 = vunpack.c.l.b16 %v343
      %v399 = vunpack.c.l.b16 %v344
      %v400 = vunpack.c.l.b16 %v345
      %v401 = vunpack.c.l.b16 %v346
      %v402 = vunpack.c.l.b16 %v347
      %v403 = vunpack.c.l.b16 %v348
      %v404 = vunpack.c.l.b16 %v349
      %v405 = vunpack.c.l.b16 %v350
      %v406 = vunpack.c.l.b16 %v351
      %v407 = vunpack.c.l.b16 %v352
      %v408 = vunpack.c.l.b16 %v353
      %v409 = vpack.c.b16 %v386, %v385
      %v410 = vpack.c.b16 %v388, %v387
      %v411 = vpack.c.b16 %v390, %v389
      %v412 = vpack.c.b16 %v392, %v391
      %v413 = vpack.c.b16 %v394, %v393
      %v414 = vpack.c.b16 %v396, %v395
      %v415 = vpack.c.b16 %v398, %v397
      %v416 = vpack.c.b16 %v400, %v399
      %v417 = vpack.c.b16 %v402, %v401
      %v418 = vpack.c.b16 %v404, %v403
      %v419 = vpack.c.b16 %v406, %v405
      %v420 = vpack.c.b16 %v408, %v407
      %v434 = vsel %vm282, %v329, 0
      %436 = vmatprep.subr.bf16.mxu0 0
      %437 = vmatpush1.bf16.msra.mxu0 %v409
      %438 = vmatprep.subr.bf16.mxu0 0
      %439 = vmatpush1.bf16.msra.mxu0 %v410
      %440 = vmatprep.subr.bf16.mxu0 0
      %441 = vmatpush1.bf16.msra.mxu0 %v411
      %442 = vmatprep.subr.bf16.mxu0 0
      %443 = vmatpush1.bf16.msra.mxu0 %v412
      %444 = vmatprep.subr.bf16.mxu0 0
      %445 = vmatpush1.bf16.msra.mxu0 %v413
      %446 = vmatprep.subr.bf16.mxu0 0
      %447 = vmatpush1.bf16.msra.mxu0 %v414
      %448 = vmatprep.subr.bf16.mxu0 0
      %449 = vmatpush1.bf16.msra.mxu0 %v415
      %450 = vmatprep.subr.bf16.mxu0 0
      %451 = vmatpush1.bf16.msra.mxu0 %v416
      %452 = vmatprep.subr.bf16.mxu0 0
      %453 = vmatpush1.bf16.msra.mxu0 %v417
      %454 = vmatprep.subr.bf16.mxu0 0
      %455 = vmatpush1.bf16.msra.mxu0 %v418
      %456 = vmatprep.subr.bf16.mxu0 0
      %457 = vmatpush1.bf16.msra.mxu0 %v419
      %458 = vmatprep.subr.bf16.mxu0 0
      %459 = vmatpush1.bf16.msra.mxu0 %v420
      %460 = vmatprep.subr.bf16.mxu0 0
      %461 = vmatpush1.bf16.msra.mxu0 0
      %462 = vmatprep.subr.bf16.mxu0 0
      %463 = vmatpush1.bf16.msra.mxu0 0
      %464 = vmatprep.subr.bf16.mxu0 0
      %465 = vmatpush1.bf16.msra.mxu0 0
      %466 = vmatprep.subr.bf16.mxu0 0
      %467 = vmatpush1.bf16.msra.mxu0 0
      %468 = vmatprep.mubr.bf16.mxu0 %v434
      %469 = vmatmul.mubr.bf16.gmra.mrb[0].mxu0 %v328
      %v470 = vpop.f32.mrb[0].mxu0
      %v471 = vadd.f32 %v359, %v470
      %v472 = vpop.f32.mrb[0].mxu0
      %v473 = vpop.f32.mrb[0].mxu0
      %v474 = vpop.f32.mrb[0].mxu0
      %475 = vdwg.mxu0
      %v476 = vld [vmem:[%s5] sm:$0x1]
      %v477 = vld [vmem:[%s6] sm:$0x1]
      %vm478 = vcmask 261120
      %v479 = vsel %vm478, %v471, 0.0
      %480 = vadd.xlane.f32.xlu0 %v479
      %v481 = vpop.xlane.xlu0 %480
      %v482 = vrcp.pop 32.0
      %v483 = vmul.f32 %v481, %v482
      %v484 = vsub.f32 %v471, %v483
      %v485 = vmul.f32 %v484, %v484
      %v486 = vsel %vm478, %v485, 0.0
      %487 = vadd.xlane.f32.xlu0 %v486
      %v488 = vpop.xlane.xlu0 %487
      %v489 = vmul.f32 %v488, %v482
      %v490 = vadd.f32 %v489, 1e-05
      %v491 = vrsqrt.pop %v490
      %v492 = vmul.f32 %v484, %v491
      %v494 = vlaneseq
      %v495 = vshrl.u32 %v494, 7
      %v496 = vsub.s32 0, %v495
      %v497 = vrot.slane %v476, %v496
      %v499 = vmul.f32 %v492, %v497
      %v501 = vlaneseq
      %v502 = vshrl.u32 %v501, 7
      %v503 = vsub.s32 0, %v502
      %v504 = vrot.slane %v477, %v503
      %v506 = vadd.f32 %v499, %v504
      %507 = vst.msk [vmem:[%s276] sm:$0xff] %vm478, %v506
      %p508 = scmp.lt.s32.totalorder %s18, 1
      %s509 = scalar_select %p508, %s18, 1
      %s510 = smul.addr %s509, 8
      %s511 = scalar_lea.vmem %s7, %s510
      // Predicated region
      $region49: #{transformer_encoder_3d.3} parent=47 // pred_check
        %p512 = pneg %p188
      $region50: #{transformer_encoder_3d.3} parent=47 // pred_check_branch
        %514 = sbr.rel (%p512) target = $region52
      $region51: #{transformer_encoder_3d.3} parent=47 // pred_region
        _
      $region52: #{transformer_encoder_3d.3} parent=47 // pred_fallthru
        _
    $region48: #{transformer_encoder_3d.3} parent=5 // pred_fallthru
      _
    %p515 = scmp.le.s32.totalorder 2, %s13
    // Predicated region
    $region53: #{transformer_encoder_3d.3} parent=5 // pred_check
      %p516 = pneg %p515
    $region54: #{transformer_encoder_3d.3} parent=5 // pred_check_branch
      %518 = sbr.rel (%p516) target = $region56
    $region55: #{transformer_encoder_3d.3} parent=5 // pred_region
      %s519 = ssub.s32 %s13, 2
      // Predicated region
      $region57: #{transformer_encoder_3d.3} parent=55 // pred_check
        %p520 = pneg %p194
      $region58: #{transformer_encoder_3d.3} parent=55 // pred_check_branch
        %522 = sbr.rel (%p520) target = $region60
      $region59: #{transformer_encoder_3d.3} parent=55 // pred_region
        %p523 = scmp.lt.s32.totalorder %s19, 1
        %s524 = scalar_select %p523, %s19, 1
        %s525 = smul.addr %s524, 8
        %s526 = scalar_lea.vmem %s7, %s525
      $region60: #{transformer_encoder_3d.3} parent=55 // pred_fallthru
        _
    $region56: #{transformer_encoder_3d.3} parent=5 // pred_fallthru
      _
  $region6: #{transformer_encoder_3d.3} parent=0 // loop_footer
    %s17 = sadd.s32 1, %s13
  $region7: #{transformer_encoder_3d.3} parent=0 // loop_footer_branch
    %12 = sbr.rel target = $region3
  $region8: #{transformer_encoder_3d.3} parent=0 // loop_exit
    _

// kernel: transformer_encoder_3d.4
$region0: #{transformer_encoder_3d.4}
  #allocation0 [shape = 'u32[]', space=smem, size = 0x4, offset = 0x4, fixed_abs, tag = 'smem constant byte address 0x4 - core index']
  #allocation1 [shape = 'u32[144,128]{1,0:T(1,128)}', space=vmem, size = 0x12000, scoped, tag = 'internal scratch']
  %s0 = inlined_call_operand.vmem [shape: f32[2,16,32], index: 0, kind: input, shape index: {}, may-alias: {0,12}]
  %s1 = inlined_call_operand.vmem [shape: f32[1,32], index: 1, kind: input, shape index: {}]
  %s2 = inlined_call_operand.vmem [shape: f32[1,32], index: 2, kind: input, shape index: {}]
  %s3 = inlined_call_operand.vmem [shape: bf16[32,96], index: 3, kind: input, shape index: {}]
  %s4 = inlined_call_operand.vmem [shape: bf16[32,32], index: 4, kind: input, shape index: {}]
  %s5 = inlined_call_operand.vmem [shape: f32[1,32], index: 5, kind: input, shape index: {}]
  %s6 = inlined_call_operand.vmem [shape: f32[1,32], index: 6, kind: input, shape index: {}]
  %s7 = inlined_call_operand.vmem [shape: f32[1,32], index: 7, kind: input, shape index: {}]
  %s8 = inlined_call_operand.vmem [shape: bf16[32,64], index: 8, kind: input, shape index: {}]
  %s9 = inlined_call_operand.vmem [shape: f32[1,64], index: 9, kind: input, shape index: {}]
  %s10 = inlined_call_operand.vmem [shape: bf16[64,32], index: 10, kind: input, shape index: {}]
  %s11 = inlined_call_operand.vmem [shape: f32[1,32], index: 11, kind: input, shape index: {}]
  %s12 = inlined_call_operand.vmem [shape: f32[2,16,32], index: 12, kind: output, shape index: {}, may-alias: {0,12}]
  %s13 = sld [smem:[#allocation0]]
  $region81: #{transformer_encoder_3d.4} parent=0
    _
  %s15 = ssub.s32 1, %s13
  %s16 = scalar_select 0, %s15, %s13
  loop: start=0, step=1, limit=4
  $region2: #{transformer_encoder_3d.4} parent=0 // loop_pre_header
    _
  $region3: #{transformer_encoder_3d.4} parent=0 // loop_header
    %s18 = sphi 0, %s22
    %p19 = scmp.ge.s32.totalorder %s18, 4
    %s28 = sphi 0, %s30
    %s31 = sphi 0, %s28
    %s32 = sphi 0, %s31
    %s48 = sphi 0, %s32
    %s52 = sphi 0, %s52
    %s54 = sphi 0, %s52
    %s55 = sphi 0, %s54
    %s69 = sphi 0, %s55
    %s73 = sphi 0, %s73
    %s75 = sphi 0, %s73
    %s76 = sphi 0, %s75
    %s90 = sphi 0, %s76
    %s94 = sphi 0, %s94
    %s96 = sphi 0, %s94
    %s97 = sphi 0, %s96
    %s111 = sphi 0, %s97
    %s115 = sphi 0, %s115
    %s117 = sphi 0, %s115
    %s118 = sphi 0, %s117
    %s132 = sphi 0, %s118
    %s136 = sphi 0, %s136
    %s138 = sphi 0, %s136
    %s139 = sphi 0, %s138
    %s153 = sphi 0, %s139
    %s157 = sphi 0, %s157
    %s159 = sphi 0, %s157
    %s160 = sphi 0, %s159
    %s174 = sphi 0, %s160
    %s178 = sphi 0, %s178
    %s180 = sphi 0, %s178
    %s181 = sphi 0, %s180
    %s195 = sphi 0, %s181
    %s199 = sphi 0, %s199
    %s201 = sphi 0, %s199
    %s202 = sphi 0, %s201
    %s216 = sphi 0, %s202
    %s220 = sphi 0, %s220
    %s222 = sphi 0, %s220
    %s223 = sphi 0, %s222
    %s237 = sphi 0, %s223
    %s241 = sphi 0, %s241
    %s243 = sphi 0, %s241
    %s244 = sphi 0, %s243
    %s258 = sphi 0, %s244
    %s262 = sphi 0, %s262
    %s264 = sphi 0, %s262
    %s265 = sphi 0, %s264
    %s279 = sphi 0, %s265
    %s285 = sphi 0, %s287
    %s288 = sphi 0, %s285
    %s289 = sphi 0, %s288
    %s305 = sphi 0, %s289
  $region4: #{transformer_encoder_3d.4} parent=0 // loop_header_branch
    %21 = sbr.rel (%p19) target = $region8
  $region5: #{transformer_encoder_3d.4} parent=0 // loop_body
    %s23 = ssub.s32 %s18, 1
    %s24 = ssub.s32 %s18, 2
    %s25 = sadd.s32 %s18, 1
    %s26 = ssub.s32 %s18, %s25
    %p27 = scmp.eq.s32.totalorder %s26, 0
    %s29 = sadd.s32 %s28, 1
    %s30 = scalar_select %p27, %s28, %s29
    %p33 = pneg %p27
    %p34 = scmp.eq.s32.totalorder %s18, 1
    %p35 = por %p33, %p34
    %p36 = scmp.ne.s32.totalorder %s28, %s31
    %p37 = scmp.eq.s32.totalorder %s18, 0
    %p38 = por %p36, %p37
    %p39 = scmp.ne.s32.totalorder %s28, %s31
    %p40 = scmp.eq.s32.totalorder %s23, 1
    %p41 = por %p39, %p40
    %p42 = scmp.ne.s32.totalorder %s31, %s32
    %p43 = scmp.eq.s32.totalorder %s23, 0
    %p44 = por %p42, %p43
    %p45 = scmp.ne.s32.totalorder %s31, %s32
    %p46 = scmp.eq.s32.totalorder %s24, 1
    %p47 = por %p45, %p46
    %p49 = scmp.ne.s32.totalorder %s32, %s48
    %p50 = scmp.eq.s32.totalorder %s24, 0
    %p51 = por %p49, %p50
    %s53 = sadd.s32 %s52, 1
    %p56 = scmp.eq.s32.totalorder %s18, 1
    %p57 = scmp.ne.s32.totalorder %s52, %s54
    %p58 = scmp.eq.s32.totalorder %s18, 0
    %p59 = por %p57, %p58
    %p60 = scmp.ne.s32.totalorder %s52, %s54
    %p61 = scmp.eq.s32.totalorder %s23, 1
    %p62 = por %p60, %p61
    %p63 = scmp.ne.s32.totalorder %s54, %s55
    %p64 = scmp.eq.s32.totalorder %s23, 0
    %p65 = por %p63, %p64
    %p66 = scmp.ne.s32.totalorder %s54, %s55
    %p67 = scmp.eq.s32.totalorder %s24, 1
    %p68 = por %p66, %p67
    %p70 = scmp.ne.s32.totalorder %s55, %s69
    %p71 = scmp.eq.s32.totalorder %s24, 0
    %p72 = por %p70, %p71
    %s74 = sadd.s32 %s73, 1
    %p77 = scmp.eq.s32.totalorder %s18, 1
    %p78 = scmp.ne.s32.totalorder %s73, %s75
    %p79 = scmp.eq.s32.totalorder %s18, 0
    %p80 = por %p78, %p79
    %p81 = scmp.ne.s32.totalorder %s73, %s75
    %p82 = scmp.eq.s32.totalorder %s23, 1
    %p83 = por %p81, %p82
    %p84 = scmp.ne.s32.totalorder %s75, %s76
    %p85 = scmp.eq.s32.totalorder %s23, 0
    %p86 = por %p84, %p85
    %p87 = scmp.ne.s32.totalorder %s75, %s76
    %p88 = scmp.eq.s32.totalorder %s24, 1
    %p89 = por %p87, %p88
    %p91 = scmp.ne.s32.totalorder %s76, %s90
    %p92 = scmp.eq.s32.totalorder %s24, 0
    %p93 = por %p91, %p92
    %s95 = sadd.s32 %s94, 1
    %p98 = scmp.eq.s32.totalorder %s18, 1
    %p99 = scmp.ne.s32.totalorder %s94, %s96
    %p100 = scmp.eq.s32.totalorder %s18, 0
    %p101 = por %p99, %p100
    %p102 = scmp.ne.s32.totalorder %s94, %s96
    %p103 = scmp.eq.s32.totalorder %s23, 1
    %p104 = por %p102, %p103
    %p105 = scmp.ne.s32.totalorder %s96, %s97
    %p106 = scmp.eq.s32.totalorder %s23, 0
    %p107 = por %p105, %p106
    %p108 = scmp.ne.s32.totalorder %s96, %s97
    %p109 = scmp.eq.s32.totalorder %s24, 1
    %p110 = por %p108, %p109
    %p112 = scmp.ne.s32.totalorder %s97, %s111
    %p113 = scmp.eq.s32.totalorder %s24, 0
    %p114 = por %p112, %p113
    %s116 = sadd.s32 %s115, 1
    %p119 = scmp.eq.s32.totalorder %s18, 1
    %p120 = scmp.ne.s32.totalorder %s115, %s117
    %p121 = scmp.eq.s32.totalorder %s18, 0
    %p122 = por %p120, %p121
    %p123 = scmp.ne.s32.totalorder %s115, %s117
    %p124 = scmp.eq.s32.totalorder %s23, 1
    %p125 = por %p123, %p124
    %p126 = scmp.ne.s32.totalorder %s117, %s118
    %p127 = scmp.eq.s32.totalorder %s23, 0
    %p128 = por %p126, %p127
    %p129 = scmp.ne.s32.totalorder %s117, %s118
    %p130 = scmp.eq.s32.totalorder %s24, 1
    %p131 = por %p129, %p130
    %p133 = scmp.ne.s32.totalorder %s118, %s132
    %p134 = scmp.eq.s32.totalorder %s24, 0
    %p135 = por %p133, %p134
    %s137 = sadd.s32 %s136, 1
    %p140 = scmp.eq.s32.totalorder %s18, 1
    %p141 = scmp.ne.s32.totalorder %s136, %s138
    %p142 = scmp.eq.s32.totalorder %s18, 0
    %p143 = por %p141, %p142
    %p144 = scmp.ne.s32.totalorder %s136, %s138
    %p145 = scmp.eq.s32.totalorder %s23, 1
    %p146 = por %p144, %p145
    %p147 = scmp.ne.s32.totalorder %s138, %s139
    %p148 = scmp.eq.s32.totalorder %s23, 0
    %p149 = por %p147, %p148
    %p150 = scmp.ne.s32.totalorder %s138, %s139
    %p151 = scmp.eq.s32.totalorder %s24, 1
    %p152 = por %p150, %p151
    %p154 = scmp.ne.s32.totalorder %s139, %s153
    %p155 = scmp.eq.s32.totalorder %s24, 0
    %p156 = por %p154, %p155
    %s158 = sadd.s32 %s157, 1
    %p161 = scmp.eq.s32.totalorder %s18, 1
    %p162 = scmp.ne.s32.totalorder %s157, %s159
    %p163 = scmp.eq.s32.totalorder %s18, 0
    %p164 = por %p162, %p163
    %p165 = scmp.ne.s32.totalorder %s157, %s159
    %p166 = scmp.eq.s32.totalorder %s23, 1
    %p167 = por %p165, %p166
    %p168 = scmp.ne.s32.totalorder %s159, %s160
    %p169 = scmp.eq.s32.totalorder %s23, 0
    %p170 = por %p168, %p169
    %p171 = scmp.ne.s32.totalorder %s159, %s160
    %p172 = scmp.eq.s32.totalorder %s24, 1
    %p173 = por %p171, %p172
    %p175 = scmp.ne.s32.totalorder %s160, %s174
    %p176 = scmp.eq.s32.totalorder %s24, 0
    %p177 = por %p175, %p176
    %s179 = sadd.s32 %s178, 1
    %p182 = scmp.eq.s32.totalorder %s18, 1
    %p183 = scmp.ne.s32.totalorder %s178, %s180
    %p184 = scmp.eq.s32.totalorder %s18, 0
    %p185 = por %p183, %p184
    %p186 = scmp.ne.s32.totalorder %s178, %s180
    %p187 = scmp.eq.s32.totalorder %s23, 1
    %p188 = por %p186, %p187
    %p189 = scmp.ne.s32.totalorder %s180, %s181
    %p190 = scmp.eq.s32.totalorder %s23, 0
    %p191 = por %p189, %p190
    %p192 = scmp.ne.s32.totalorder %s180, %s181
    %p193 = scmp.eq.s32.totalorder %s24, 1
    %p194 = por %p192, %p193
    %p196 = scmp.ne.s32.totalorder %s181, %s195
    %p197 = scmp.eq.s32.totalorder %s24, 0
    %p198 = por %p196, %p197
    %s200 = sadd.s32 %s199, 1
    %p203 = scmp.eq.s32.totalorder %s18, 1
    %p204 = scmp.ne.s32.totalorder %s199, %s201
    %p205 = scmp.eq.s32.totalorder %s18, 0
    %p206 = por %p204, %p205
    %p207 = scmp.ne.s32.totalorder %s199, %s201
    %p208 = scmp.eq.s32.totalorder %s23, 1
    %p209 = por %p207, %p208
    %p210 = scmp.ne.s32.totalorder %s201, %s202
    %p211 = scmp.eq.s32.totalorder %s23, 0
    %p212 = por %p210, %p211
    %p213 = scmp.ne.s32.totalorder %s201, %s202
    %p214 = scmp.eq.s32.totalorder %s24, 1
    %p215 = por %p213, %p214
    %p217 = scmp.ne.s32.totalorder %s202, %s216
    %p218 = scmp.eq.s32.totalorder %s24, 0
    %p219 = por %p217, %p218
    %s221 = sadd.s32 %s220, 1
    %p224 = scmp.eq.s32.totalorder %s18, 1
    %p225 = scmp.ne.s32.totalorder %s220, %s222
    %p226 = scmp.eq.s32.totalorder %s18, 0
    %p227 = por %p225, %p226
    %p228 = scmp.ne.s32.totalorder %s220, %s222
    %p229 = scmp.eq.s32.totalorder %s23, 1
    %p230 = por %p228, %p229
    %p231 = scmp.ne.s32.totalorder %s222, %s223
    %p232 = scmp.eq.s32.totalorder %s23, 0
    %p233 = por %p231, %p232
    %p234 = scmp.ne.s32.totalorder %s222, %s223
    %p235 = scmp.eq.s32.totalorder %s24, 1
    %p236 = por %p234, %p235
    %p238 = scmp.ne.s32.totalorder %s223, %s237
    %p239 = scmp.eq.s32.totalorder %s24, 0
    %p240 = por %p238, %p239
    %s242 = sadd.s32 %s241, 1
    %p245 = scmp.eq.s32.totalorder %s18, 1
    %p246 = scmp.ne.s32.totalorder %s241, %s243
    %p247 = scmp.eq.s32.totalorder %s18, 0
    %p248 = por %p246, %p247
    %p249 = scmp.ne.s32.totalorder %s241, %s243
    %p250 = scmp.eq.s32.totalorder %s23, 1
    %p251 = por %p249, %p250
    %p252 = scmp.ne.s32.totalorder %s243, %s244
    %p253 = scmp.eq.s32.totalorder %s23, 0
    %p254 = por %p252, %p253
    %p255 = scmp.ne.s32.totalorder %s243, %s244
    %p256 = scmp.eq.s32.totalorder %s24, 1
    %p257 = por %p255, %p256
    %p259 = scmp.ne.s32.totalorder %s244, %s258
    %p260 = scmp.eq.s32.totalorder %s24, 0
    %p261 = por %p259, %p260
    %s263 = sadd.s32 %s262, 1
    %p266 = scmp.eq.s32.totalorder %s18, 1
    %p267 = scmp.ne.s32.totalorder %s262, %s264
    %p268 = scmp.eq.s32.totalorder %s18, 0
    %p269 = por %p267, %p268
    %p270 = scmp.ne.s32.totalorder %s262, %s264
    %p271 = scmp.eq.s32.totalorder %s23, 1
    %p272 = por %p270, %p271
    %p273 = scmp.ne.s32.totalorder %s264, %s265
    %p274 = scmp.eq.s32.totalorder %s23, 0
    %p275 = por %p273, %p274
    %p276 = scmp.ne.s32.totalorder %s264, %s265
    %p277 = scmp.eq.s32.totalorder %s24, 1
    %p278 = por %p276, %p277
    %p280 = scmp.ne.s32.totalorder %s265, %s279
    %p281 = scmp.eq.s32.totalorder %s24, 0
    %p282 = por %p280, %p281
    %s283 = ssub.s32 %s18, %s25
    %p284 = scmp.eq.s32.totalorder %s283, 0
    %s286 = sadd.s32 %s285, 1
    %s287 = scalar_select %p284, %s285, %s286
    %p290 = pneg %p284
    %p291 = scmp.eq.s32.totalorder %s18, 1
    %p292 = por %p290, %p291
    %p293 = scmp.ne.s32.totalorder %s285, %s288
    %p294 = scmp.eq.s32.totalorder %s18, 0
    %p295 = por %p293, %p294
    %p296 = scmp.ne.s32.totalorder %s285, %s288
    %p297 = scmp.eq.s32.totalorder %s23, 1
    %p298 = por %p296, %p297
    %p299 = scmp.ne.s32.totalorder %s288, %s289
    %p300 = scmp.eq.s32.totalorder %s23, 0
    %p301 = por %p299, %p300
    %p302 = scmp.ne.s32.totalorder %s288, %s289
    %p303 = scmp.eq.s32.totalorder %s24, 1
    %p304 = por %p302, %p303
    %p306 = scmp.ne.s32.totalorder %s289, %s305
    %p307 = scmp.eq.s32.totalorder %s24, 0
    %p308 = por %p306, %p307
    %p309 = scmp.le.s32.totalorder 1, %s18
    %p310 = scmp.lt.s32.totalorder %s18, 3
    %p311 = pnand %p309, %p310
    %p312 = pneg %p311
    // Predicated region
    $region9: #{transformer_encoder_3d.4} parent=5 // pred_check
      _
    $region10: #{transformer_encoder_3d.4} parent=5 // pred_check_branch
      %314 = sbr.rel (%p311) target = $region12
    $region11: #{transformer_encoder_3d.4} parent=5 // pred_region
      %s315 = ssub.s32 %s18, 1
      // Predicated region
      $region13: #{transformer_encoder_3d.4} parent=11 // pred_check
        %p316 = pneg %p65
      $region14: #{transformer_encoder_3d.4} parent=11 // pred_check_branch
        %318 = sbr.rel (%p316) target = $region16
      $region15: #{transformer_encoder_3d.4} parent=11 // pred_region
        _
      $region16: #{transformer_encoder_3d.4} parent=11 // pred_fallthru
        _
      // Predicated region
      $region17: #{transformer_encoder_3d.4} parent=11 // pred_check
        %p319 = pneg %p86
      $region18: #{transformer_encoder_3d.4} parent=11 // pred_check_branch
        %321 = sbr.rel (%p319) target = $region20
      $region19: #{transformer_encoder_3d.4} parent=11 // pred_region
        _
      $region20: #{transformer_encoder_3d.4} parent=11 // pred_fallthru
        _
      // Predicated region
      $region21: #{transformer_encoder_3d.4} parent=11 // pred_check
        %p322 = pneg %p107
      $region22: #{transformer_encoder_3d.4} parent=11 // pred_check_branch
        %324 = sbr.rel (%p322) target = $region24
      $region23: #{transformer_encoder_3d.4} parent=11 // pred_region
        _
      $region24: #{transformer_encoder_3d.4} parent=11 // pred_fallthru
        _
      // Predicated region
      $region25: #{transformer_encoder_3d.4} parent=11 // pred_check
        %p325 = pneg %p128
      $region26: #{transformer_encoder_3d.4} parent=11 // pred_check_branch
        %327 = sbr.rel (%p325) target = $region28
      $region27: #{transformer_encoder_3d.4} parent=11 // pred_region
        _
      $region28: #{transformer_encoder_3d.4} parent=11 // pred_fallthru
        _
      // Predicated region
      $region29: #{transformer_encoder_3d.4} parent=11 // pred_check
        %p328 = pneg %p149
      $region30: #{transformer_encoder_3d.4} parent=11 // pred_check_branch
        %330 = sbr.rel (%p328) target = $region32
      $region31: #{transformer_encoder_3d.4} parent=11 // pred_region
        _
      $region32: #{transformer_encoder_3d.4} parent=11 // pred_fallthru
        _
      // Predicated region
      $region33: #{transformer_encoder_3d.4} parent=11 // pred_check
        %p331 = pneg %p170
      $region34: #{transformer_encoder_3d.4} parent=11 // pred_check_branch
        %333 = sbr.rel (%p331) target = $region36
      $region35: #{transformer_encoder_3d.4} parent=11 // pred_region
        _
      $region36: #{transformer_encoder_3d.4} parent=11 // pred_fallthru
        _
      // Predicated region
      $region37: #{transformer_encoder_3d.4} parent=11 // pred_check
        %p334 = pneg %p191
      $region38: #{transformer_encoder_3d.4} parent=11 // pred_check_branch
        %336 = sbr.rel (%p334) target = $region40
      $region39: #{transformer_encoder_3d.4} parent=11 // pred_region
        _
      $region40: #{transformer_encoder_3d.4} parent=11 // pred_fallthru
        _
      // Predicated region
      $region41: #{transformer_encoder_3d.4} parent=11 // pred_check
        %p337 = pneg %p212
      $region42: #{transformer_encoder_3d.4} parent=11 // pred_check_branch
        %339 = sbr.rel (%p337) target = $region44
      $region43: #{transformer_encoder_3d.4} parent=11 // pred_region
        _
      $region44: #{transformer_encoder_3d.4} parent=11 // pred_fallthru
        _
      // Predicated region
      $region45: #{transformer_encoder_3d.4} parent=11 // pred_check
        %p340 = pneg %p233
      $region46: #{transformer_encoder_3d.4} parent=11 // pred_check_branch
        %342 = sbr.rel (%p340) target = $region48
      $region47: #{transformer_encoder_3d.4} parent=11 // pred_region
        _
      $region48: #{transformer_encoder_3d.4} parent=11 // pred_fallthru
        _
      // Predicated region
      $region49: #{transformer_encoder_3d.4} parent=11 // pred_check
        %p343 = pneg %p254
      $region50: #{transformer_encoder_3d.4} parent=11 // pred_check_branch
        %345 = sbr.rel (%p343) target = $region52
      $region51: #{transformer_encoder_3d.4} parent=11 // pred_region
        _
      $region52: #{transformer_encoder_3d.4} parent=11 // pred_fallthru
        _
      // Predicated region
      $region53: #{transformer_encoder_3d.4} parent=11 // pred_check
        %p346 = pneg %p275
      $region54: #{transformer_encoder_3d.4} parent=11 // pred_check_branch
        %348 = sbr.rel (%p346) target = $region56
      $region55: #{transformer_encoder_3d.4} parent=11 // pred_region
        _
      $region56: #{transformer_encoder_3d.4} parent=11 // pred_fallthru
        _
    $region12: #{transformer_encoder_3d.4} parent=5 // pred_fallthru
      _
    %p349 = scmp.lt.s32.totalorder %s18, 2
    // Predicated region
    $region57: #{transformer_encoder_3d.4} parent=5 // pred_check
      %p350 = pneg %p349
    $region58: #{transformer_encoder_3d.4} parent=5 // pred_check_branch
      %352 = sbr.rel (%p350) target = $region60
    $region59: #{transformer_encoder_3d.4} parent=5 // pred_region
      // Predicated region
      $region61: #{transformer_encoder_3d.4} parent=59 // pred_check
        %p353 = pneg %p38
      $region62: #{transformer_encoder_3d.4} parent=59 // pred_check_branch
        %355 = sbr.rel (%p353) target = $region64
      $region63: #{transformer_encoder_3d.4} parent=59 // pred_region
        %p356 = scmp.lt.s32.totalorder %s18, 1
        %s357 = scalar_select %p356, %s18, 1
        %s358 = smul.addr %s357, 2
        %s359 = smul.addr %s358, 8
        %s360 = scalar_lea.vmem %s0, %s359
      $region64: #{transformer_encoder_3d.4} parent=59 // pred_fallthru
        _
    $region60: #{transformer_encoder_3d.4} parent=5 // pred_fallthru
      _
    %p361 = scmp.le.s32.totalorder 1, %s18
    %p362 = scmp.lt.s32.totalorder %s18, 3
    %p363 = pnand %p361, %p362
    %p364 = pneg %p363
    // Predicated region
    $region65: #{transformer_encoder_3d.4} parent=5 // pred_check
      _
    $region66: #{transformer_encoder_3d.4} parent=5 // pred_check_branch
      %366 = sbr.rel (%p363) target = $region68
    $region67: #{transformer_encoder_3d.4} parent=5 // pred_region
      %s367 = ssub.s32 %s18, 1
      %p368 = scmp.lt.s32.totalorder %s23, 1
      %s369 = scalar_select %p368, %s23, 1
      %s370 = smul.addr %s369, 2
      %s371 = smul.addr %s370, 8
      %s372 = scalar_lea.vmem %s0, %s371
      %p373 = pneg %p44
      %p374 = pneg %p41
      %p375 = pneg %p65
      %p376 = pneg %p62
      %p377 = pneg %p86
      %p378 = pneg %p83
      %p379 = pneg %p107
      %p380 = pneg %p104
      %p381 = pneg %p128
      %p382 = pneg %p125
      %p383 = pneg %p149
      %p384 = pneg %p146
      %p385 = pneg %p170
      %p386 = pneg %p167
      %p387 = pneg %p191
      %p388 = pneg %p188
      %p389 = pneg %p212
      %p390 = pneg %p209
      %p391 = pneg %p233
      %p392 = pneg %p230
      %p393 = pneg %p254
      %p394 = pneg %p251
      %p395 = pneg %p275
      %p396 = pneg %p272
      %p397 = pneg %p301
      %p398 = pneg %p298
      %p399 = scmp.lt.s32.totalorder %s23, 1
      %s400 = scalar_select %p399, %s23, 1
      %s401 = smul.addr %s400, 2
      %s402 = smul.addr %s401, 8
      %s403 = scalar_lea.vmem %s12, %s402
      %p404 = scmp.lt.s32.totalorder %s23, 1
      %s405 = scalar_select %p404, %s23, 1
      %s406 = smul.addr %s405, 2
      %s407 = smul.addr %s406, 8
      %s408 = scalar_lea.vmem %s0, %s407
      %p409 = scmp.lt.s32.totalorder %s23, 1
      %s410 = scalar_select %p409, %s23, 1
      %s411 = smul.addr %s410, 2
      %s412 = smul.addr %s411, 8
      %s413 = scalar_lea.vmem %s12, %s412
      %v415 = vld [vmem:[%s408] sm:$0xff]
      %v416 = vld [vmem:[%s408 + $0x8] sm:$0xff]
      %v417 = vld [vmem:[%s1] sm:$0x1]
      %v418 = vld [vmem:[%s2] sm:$0x1]
      %vm419 = vcmask 261120
      %v420 = vsel %vm419, %v415, 0.0
      %421 = vadd.xlane.f32.xlu0 %v420
      %v422 = vpop.xlane.xlu0 %421
      %v423 = vsel %vm419, %v416, 0.0
      %424 = vadd.xlane.f32.xlu0 %v423
      %v425 = vpop.xlane.xlu0 %424
      %v426 = vrcp.pop 32.0
      %v427 = vmul.f32 %v422, %v426
      %v428 = vmul.f32 %v425, %v426
      %v429 = vsub.f32 %v415, %v427
      %v430 = vsub.f32 %v416, %v428
      %v431 = vmul.f32 %v429, %v429
      %v432 = vmul.f32 %v430, %v430
      %v433 = vsel %vm419, %v431, 0.0
      %434 = vadd.xlane.f32.xlu0 %v433
      %v435 = vpop.xlane.xlu0 %434
      %v436 = vsel %vm419, %v432, 0.0
      %437 = vadd.xlane.f32.xlu0 %v436
      %v438 = vpop.xlane.xlu0 %437
      %v439 = vmul.f32 %v435, %v426
      %v440 = vmul.f32 %v438, %v426
      %v441 = vadd.f32 %v439, 1e-05
      %v442 = vadd.f32 %v440, 1e-05
      %v443 = vrsqrt.pop %v441
      %v444 = vrsqrt.pop %v442
      %v445 = vmul.f32 %v429, %v443
      %v446 = vmul.f32 %v430, %v444
      %v448 = vlaneseq
      %v449 = vshrl.u32 %v448, 7
      %v450 = vsub.s32 0, %v449
      %v451 = vrot.slane %v417, %v450
      %v453 = vmul.f32 %v445, %v451
      %v454 = vmul.f32 %v446, %v451
      %v456 = vlaneseq
      %v457 = vshrl.u32 %v456, 7
      %v458 = vsub.s32 0, %v457
      %v459 = vrot.slane %v418, %v458
      %v461 = vadd.f32 %v453, %v459
      %v462 = vadd.f32 %v454, %v459
      %v463 = vpack.c.bf16 %v462, %v461
      %v464 = vld [vmem:[%s3] sm:$0xf]
      %v465 = vld [vmem:[%s3 + $0x4] sm:$0xf]
      %v466 = vld [vmem:[%s3 + $0x8] sm:$0xf]
      %v467 = vld [vmem:[%s3 + $0xc] sm:$0xf]
      %v472 = vunpack.c.l.b16 %v464
      %v473 = vunpack.c.l.b16 %v465
      %v474 = vunpack.c.l.b16 %v466
      %v475 = vunpack.c.l.b16 %v467
      %v476 = vpack.c.b16 %v473, %v472
      %v477 = vpack.c.b16 %v475, %v474
      %v481 = vsel %vm419, %v463, 0
      %483 = vmatprep.subr.bf16.mxu0 0
      %484 = vmatpush1.bf16.msra.mxu0 %v476
      %485 = vmatprep.subr.bf16.mxu0 0
      %486 = vmatpush1.bf16.msra.mxu0 %v477
      %487 = vmatprep.subr.bf16.mxu0 0
      %488 = vmatpush1.bf16.msra.mxu0 0
      %489 = vmatprep.subr.bf16.mxu0 0
      %490 = vmatpush1.bf16.msra.mxu0 0
      %491 = vmatprep.subr.bf16.mxu0 0
      %492 = vmatpush1.bf16.msra.mxu0 0
      %493 = vmatprep.subr.bf16.mxu0 0
      %494 = vmatpush1.bf16.msra.mxu0 0
      %495 = vmatprep.subr.bf16.mxu0 0
      %496 = vmatpush1.bf16.msra.mxu0 0
      %497 = vmatprep.subr.bf16.mxu0 0
      %498 = vmatpush1.bf16.msra.mxu0 0
      %499 = vmatprep.subr.bf16.mxu0 0
      %500 = vmatpush1.bf16.msra.mxu0 0
      %501 = vmatprep.subr.bf16.mxu0 0
      %502 = vmatpush1.bf16.msra.mxu0 0
      %503 = vmatprep.subr.bf16.mxu0 0
      %504 = vmatpush1.bf16.msra.mxu0 0
      %505 = vmatprep.subr.bf16.mxu0 0
      %506 = vmatpush1.bf16.msra.mxu0 0
      %507 = vmatprep.subr.bf16.mxu0 0
      %508 = vmatpush1.bf16.msra.mxu0 0
      %509 = vmatprep.subr.bf16.mxu0 0
      %510 = vmatpush1.bf16.msra.mxu0 0
      %511 = vmatprep.subr.bf16.mxu0 0
      %512 = vmatpush1.bf16.msra.mxu0 0
      %513 = vmatprep.subr.bf16.mxu0 0
      %514 = vmatpush1.bf16.msra.mxu0 0
      %515 = vmatprep.mubr.bf16.mxu0 0
      %516 = vmatmul.mubr.bf16.gmra.mrb[0].mxu0 %v481
      %v517 = vpop.f32.mrb[0].mxu0
      %v518 = vadd.f32 0.0, %v517
      %v519 = vpop.f32.mrb[0].mxu0
      %v520 = vpop.f32.mrb[0].mxu0
      %v521 = vadd.f32 0.0, %v520
      %v522 = vpop.f32.mrb[0].mxu0
      %523 = vdwg.mxu0
      %526 = vrot.lane.b32.xlu0 %v518, 112
      %v527 = vpop.permute.xlu0 %526
      %528 = vrot.lane.b32.xlu0 %v521, 112
      %v529 = vpop.permute.xlu0 %528
      %v532 = vpack.c.bf16 %v521, %v518
      %v533 = vpack.c.bf16 %v529, %v527
      %535 = vrot.lane.b32.xlu0 %v532, 96
      %v536 = vpop.permute.xlu0 %535
      %vm537 = vcmask 130048
      %v539 = vsel %vm537, %v532, 0
      %v542 = vsel %vm537, %v536, 0
      %544 = vmatprep.subr.bf16.mxu0 0
      %545 = vmatpush1.bf16.xpose.msra.mxu0 %v542
      %546 = vmatprep.subr.bf16.mxu0 0
      %547 = vmatpush1.bf16.xpose.msra.mxu0 0
      %548 = vmatprep.subr.bf16.mxu0 0
      %549 = vmatpush1.bf16.xpose.msra.mxu0 0
      %550 = vmatprep.subr.bf16.mxu0 0
      %551 = vmatpush1.bf16.xpose.msra.mxu0 0
      %552 = vmatprep.subr.bf16.mxu0 0
      %553 = vmatpush1.bf16.xpose.msra.mxu0 0
      %554 = vmatprep.subr.bf16.mxu0 0
      %555 = vmatpush1.bf16.xpose.msra.mxu0 0
      %556 = vmatprep.subr.bf16.mxu0 0
      %557 = vmatpush1.bf16.xpose.msra.mxu0 0
      %558 = vmatprep.subr.bf16.mxu0 0
      %559 = vmatpush1.bf16.xpose.msra.mxu0 0
      %560 = vmatprep.subr.bf16.mxu0 0
      %561 = vmatpush1.bf16.xpose.msra.mxu0 0
      %562 = vmatprep.subr.bf16.mxu0 0
      %563 = vmatpush1.bf16.xpose.msra.mxu0 0
      %564 = vmatprep.subr.bf16.mxu0 0
      %565 = vmatpush1.bf16.xpose.msra.mxu0 0
      %566 = vmatprep.subr.bf16.mxu0 0
      %567 = vmatpush1.bf16.xpose.msra.mxu0 0
      %568 = vmatprep.subr.bf16.mxu0 0
      %569 = vmatpush1.bf16.xpose.msra.mxu0 0
      %570 = vmatprep.subr.bf16.mxu0 0
      %571 = vmatpush1.bf16.xpose.msra.mxu0 0
      %572 = vmatprep.subr.bf16.mxu0 0
      %573 = vmatpush1.bf16.xpose.msra.mxu0 0
      %574 = vmatprep.subr.bf16.mxu0 0
      %575 = vmatpush1.bf16.xpose.msra.mxu0 0
      %576 = vmatprep.mubr.bf16.mxu0 0
      %577 = vmatmul.mubr.bf16.gmra.mrb[0].mxu0 %v539
      %v578 = vpop.f32.mrb[0].mxu0
      %v579 = vadd.f32 0.0, %v578
      %v580 = vpop.f32.mrb[0].mxu0
      %v581 = vpop.f32.mrb[0].mxu0
      %v582 = vadd.f32 0.0, %v581
      %v583 = vpop.f32.mrb[0].mxu0
      %584 = vdwg.mxu0
      %586 = vrot.lane.b32.xlu0 %v533, 96
      %v587 = vpop.permute.xlu0 %586
      %v589 = vsel %vm537, %v533, 0
      %v592 = vsel %vm537, %v587, 0
      %594 = vmatprep.subr.bf16.mxu0 0
      %595 = vmatpush1.bf16.xpose.msra.mxu0 %v592
      %596 = vmatprep.subr.bf16.mxu0 0
      %597 = vmatpush1.bf16.xpose.msra.mxu0 0
      %598 = vmatprep.subr.bf16.mxu0 0
      %599 = vmatpush1.bf16.xpose.msra.mxu0 0
      %600 = vmatprep.subr.bf16.mxu0 0
      %601 = vmatpush1.bf16.xpose.msra.mxu0 0
      %602 = vmatprep.subr.bf16.mxu0 0
      %603 = vmatpush1.bf16.xpose.msra.mxu0 0
      %604 = vmatprep.subr.bf16.mxu0 0
      %605 = vmatpush1.bf16.xpose.msra.mxu0 0
      %606 = vmatprep.subr.bf16.mxu0 0
      %607 = vmatpush1.bf16.xpose.msra.mxu0 0
      %608 = vmatprep.subr.bf16.mxu0 0
      %609 = vmatpush1.bf16.xpose.msra.mxu0 0
      %610 = vmatprep.subr.bf16.mxu0 0
      %611 = vmatpush1.bf16.xpose.msra.mxu0 0
      %612 = vmatprep.subr.bf16.mxu0 0
      %613 = vmatpush1.bf16.xpose.msra.mxu0 0
      %614 = vmatprep.subr.bf16.mxu0 0
      %615 = vmatpush1.bf16.xpose.msra.mxu0 0
      %616 = vmatprep.subr.bf16.mxu0 0
      %617 = vmatpush1.bf16.xpose.msra.mxu0 0
      %618 = vmatprep.subr.bf16.mxu0 0
      %619 = vmatpush1.bf16.xpose.msra.mxu0 0
      %620 = vmatprep.subr.bf16.mxu0 0
      %621 = vmatpush1.bf16.xpose.msra.mxu0 0
      %622 = vmatprep.subr.bf16.mxu0 0
      %623 = vmatpush1.bf16.xpose.msra.mxu0 0
      %624 = vmatprep.subr.bf16.mxu0 0
      %625 = vmatpush1.bf16.xpose.msra.mxu0 0
      %626 = vmatprep.mubr.bf16.mxu0 0
      %627 = vmatmul.mubr.bf16.gmra.mrb[0].mxu0 %v589
      %v628 = vpop.f32.mrb[0].mxu0
      %v629 = vadd.f32 0.0, %v628
      %v630 = vpop.f32.mrb[0].mxu0
      %v631 = vpop.f32.mrb[0].mxu0
      %v632 = vadd.f32 0.0, %v631
      %v633 = vpop.f32.mrb[0].mxu0
      %634 = vdwg.mxu0
      %v635 = vlaneseq
      %v636 = vand.u32 %v635, 127
      %vm637 = vcmp.lt.s32.totalorder %v636, 9
      %v638 = vsel %vm637, %v579, -1e+30
      %v639 = vsel %vm637, %v582, -1e+30
      %v640 = vsel %vm637, %v629, -1e+30
      %v641 = vsel %vm637, %v632, -1e+30
      %v642 = vsel %vm537, %v638, -inf
      %643 = vmax.xlane.f32.xlu0 %v642
      %v644 = vpop.xlane.xlu0 %643
      %v645 = vsel %vm537, %v639, -inf
      %646 = vmax.xlane.f32.xlu0 %v645
      %v647 = vpop.xlane.xlu0 %646
      %v648 = vsel %vm537, %v640, -inf
      %649 = vmax.xlane.f32.xlu0 %v648
      %v650 = vpop.xlane.xlu0 %649
      %v651 = vsel %vm537, %v641, -inf
      %652 = vmax.xlane.f32.xlu0 %v651
      %v653 = vpop.xlane.xlu0 %652
      %v654 = vsub.f32 %v638, %v644
      %v655 = vsub.f32 %v639, %v647
      %v656 = vsub.f32 %v640, %v650
      %v657 = vsub.f32 %v641, %v653
      %v658 = vmul.f32 %v654, 1.442695
      %v659 = vpow.pop %v658
      %v660 = vmul.f32 %v655, 1.442695
      %v661 = vpow.pop %v660
      %v662 = vmul.f32 %v656, 1.442695
      %v663 = vpow.pop %v662
      %v664 = vmul.f32 %v657, 1.442695
      %v665 = vpow.pop %v664
      %v666 = vsel %vm537, %v659, 0.0
      %667 = vadd.xlane.f32.xlu0 %v666
      %v668 = vpop.xlane.xlu0 %667
      %v669 = vsel %vm537, %v661, 0.0
      %670 = vadd.xlane.f32.xlu0 %v669
      %v671 = vpop.xlane.xlu0 %670
      %v672 = vsel %vm537, %v663, 0.0
      %673 = vadd.xlane.f32.xlu0 %v672
      %v674 = vpop.xlane.xlu0 %673
      %v675 = vsel %vm537, %v665, 0.0
      %676 = vadd.xlane.f32.xlu0 %v675
      %v677 = vpop.xlane.xlu0 %676
      %v678 = vrcp.pop %v668
      %v679 = vrcp.pop %v671
      %v680 = vrcp.pop %v674
      %v681 = vrcp.pop %v677
      %v682 = vmul.f32 %v659, %v678
      %v683 = vmul.f32 %v661, %v679
      %v684 = vmul.f32 %v663, %v680
      %v685 = vmul.f32 %v665, %v681
      %v686 = vpack.c.bf16 %v683, %v682
      %v687 = vpack.c.bf16 %v685, %v684
      %688 = vrot.lane.b32.xlu0 %v532, 64
      %v689 = vpop.permute.xlu0 %688
      %v692 = vsel %vm537, %v686, 0
      %694 = vmatprep.subr.bf16.mxu0 0
      %695 = vmatpush1.bf16.msra.mxu0 %v689
      %696 = vmatprep.subr.bf16.mxu0 0
      %697 = vmatpush1.bf16.msra.mxu0 0
      %698 = vmatprep.subr.bf16.mxu0 0
      %699 = vmatpush1.bf16.msra.mxu0 0
      %700 = vmatprep.subr.bf16.mxu0 0
      %701 = vmatpush1.bf16.msra.mxu0 0
      %702 = vmatprep.subr.bf16.mxu0 0
      %703 = vmatpush1.bf16.msra.mxu0 0
      %704 = vmatprep.subr.bf16.mxu0 0
      %705 = vmatpush1.bf16.msra.mxu0 0
      %706 = vmatprep.subr.bf16.mxu0 0
      %707 = vmatpush1.bf16.msra.mxu0 0
      %708 = vmatprep.subr.bf16.mxu0 0
      %709 = vmatpush1.bf16.msra.mxu0 0
      %710 = vmatprep.subr.bf16.mxu0 0
      %711 = vmatpush1.bf16.msra.mxu0 0
      %712 = vmatprep.subr.bf16.mxu0 0
      %713 = vmatpush1.bf16.msra.mxu0 0
      %714 = vmatprep.subr.bf16.mxu0 0
      %715 = vmatpush1.bf16.msra.mxu0 0
      %716 = vmatprep.subr.bf16.mxu0 0
      %717 = vmatpush1.bf16.msra.mxu0 0
      %718 = vmatprep.subr.bf16.mxu0 0
      %719 = vmatpush1.bf16.msra.mxu0 0
      %720 = vmatprep.subr.bf16.mxu0 0
      %721 = vmatpush1.bf16.msra.mxu0 0
      %722 = vmatprep.subr.bf16.mxu0 0
      %723 = vmatpush1.bf16.msra.mxu0 0
      %724 = vmatprep.subr.bf16.mxu0 0
      %725 = vmatpush1.bf16.msra.mxu0 0
      %726 = vmatprep.mubr.bf16.mxu0 0
      %727 = vmatmul.mubr.bf16.gmra.mrb[0].mxu0 %v692
      %v728 = vpop.f32.mrb[0].mxu0
      %v729 = vadd.f32 0.0, %v728
      %v730 = vpop.f32.mrb[0].mxu0
      %v731 = vpop.f32.mrb[0].mxu0
      %v732 = vadd.f32 0.0, %v731
      %v733 = vpop.f32.mrb[0].mxu0
      %734 = vdwg.mxu0
      %735 = vrot.lane.b32.xlu0 %v533, 64
      %v736 = vpop.permute.xlu0 %735
      %v739 = vsel %vm537, %v687, 0
      %741 = vmatprep.subr.bf16.mxu0 0
      %742 = vmatpush1.bf16.msra.mxu0 %v736
      %743 = vmatprep.subr.bf16.mxu0 0
      %744 = vmatpush1.bf16.msra.mxu0 0
      %745 = vmatprep.subr.bf16.mxu0 0
      %746 = vmatpush1.bf16.msra.mxu0 0
      %747 = vmatprep.subr.bf16.mxu0 0
      %748 = vmatpush1.bf16.msra.mxu0 0
      %749 = vmatprep.subr.bf16.mxu0 0
      %750 = vmatpush1.bf16.msra.mxu0 0
      %751 = vmatprep.subr.bf16.mxu0 0
      %752 = vmatpush1.bf16.msra.mxu0 0
      %753 = vmatprep.subr.bf16.mxu0 0
      %754 = vmatpush1.bf16.msra.mxu0 0
      %755 = vmatprep.subr.bf16.mxu0 0
      %756 = vmatpush1.bf16.msra.mxu0 0
      %757 = vmatprep.subr.bf16.mxu0 0
      %758 = vmatpush1.bf16.msra.mxu0 0
      %759 = vmatprep.subr.bf16.mxu0 0
      %760 = vmatpush1.bf16.msra.mxu0 0
      %761 = vmatprep.subr.bf16.mxu0 0
      %762 = vmatpush1.bf16.msra.mxu0 0
      %763 = vmatprep.subr.bf16.mxu0 0
      %764 = vmatpush1.bf16.msra.mxu0 0
      %765 = vmatprep.subr.bf16.mxu0 0
      %766 = vmatpush1.bf16.msra.mxu0 0
      %767 = vmatprep.subr.bf16.mxu0 0
      %768 = vmatpush1.bf16.msra.mxu0 0
      %769 = vmatprep.subr.bf16.mxu0 0
      %770 = vmatpush1.bf16.msra.mxu0 0
      %771 = vmatprep.subr.bf16.mxu0 0
      %772 = vmatpush1.bf16.msra.mxu0 0
      %773 = vmatprep.mubr.bf16.mxu0 0
      %774 = vmatmul.mubr.bf16.gmra.mrb[0].mxu0 %v739
      %v775 = vpop.f32.mrb[0].mxu0
      %v776 = vadd.f32 0.0, %v775
      %v777 = vpop.f32.mrb[0].mxu0
      %v778 = vpop.f32.mrb[0].mxu0
      %v779 = vadd.f32 0.0, %v778
      %v780 = vpop.f32.mrb[0].mxu0
      %781 = vdwg.mxu0
      %784 = vrot.lane.b32.xlu0 %v776, 16
      %v785 = vpop.permute.xlu0 %784
      %786 = vrot.lane.b32.xlu0 %v779, 16
      %v787 = vpop.permute.xlu0 %786
      %v790 = vsel %vm537, %v729, %v785
      %v791 = vsel %vm537, %v732, %v787
      %v792 = vpack.c.bf16 %v791, %v790
      %v793 = vld [vmem:[%s4] sm:$0xf]
      %v794 = vld [vmem:[%s4 + $0x4] sm:$0xf]
      %v795 = vld [vmem:[%s4 + $0x8] sm:$0xf]
      %v796 = vld [vmem:[%s4 + $0xc] sm:$0xf]
      %v801 = vunpack.c.l.b16 %v793
      %v802 = vunpack.c.l.b16 %v794
      %v803 = vunpack.c.l.b16 %v795
      %v804 = vunpack.c.l.b16 %v796
      %v805 = vpack.c.b16 %v802, %v801
      %v806 = vpack.c.b16 %v804, %v803
      %v810 = vsel %vm419, %v792, 0
      %812 = vmatprep.subr.bf16.mxu0 0
      %813 = vmatpush1.bf16.msra.mxu0 %v805
      %814 = vmatprep.subr.bf16.mxu0 0
      %815 = vmatpush1.bf16.msra.mxu0 %v806
      %816 = vmatprep.subr.bf16.mxu0 0
      %817 = vmatpush1.bf16.msra.mxu0 0
      %818 = vmatprep.subr.bf16.mxu0 0
      %819 = vmatpush1.bf16.msra.mxu0 0
      %820 = vmatprep.subr.bf16.mxu0 0
      %821 = vmatpush1.bf16.msra.mxu0 0
      %822 = vmatprep.subr.bf16.mxu0 0
      %823 = vmatpush1.bf16.msra.mxu0 0
      %824 = vmatprep.subr.bf16.mxu0 0
      %825 = vmatpush1.bf16.msra.mxu0 0
      %826 = vmatprep.subr.bf16.mxu0 0
      %827 = vmatpush1.bf16.msra.mxu0 0
      %828 = vmatprep.subr.bf16.mxu0 0
      %829 = vmatpush1.bf16.msra.mxu0 0
      %830 = vmatprep.subr.bf16.mxu0 0
      %831 = vmatpush1.bf16.msra.mxu0 0
      %832 = vmatprep.subr.bf16.mxu0 0
      %833 = vmatpush1.bf16.msra.mxu0 0
      %834 = vmatprep.subr.bf16.mxu0 0
      %835 = vmatpush1.bf16.msra.mxu0 0
      %836 = vmatprep.subr.bf16.mxu0 0
      %837 = vmatpush1.bf16.msra.mxu0 0
      %838 = vmatprep.subr.bf16.mxu0 0
      %839 = vmatpush1.bf16.msra.mxu0 0
      %840 = vmatprep.subr.bf16.mxu0 0
      %841 = vmatpush1.bf16.msra.mxu0 0
      %842 = vmatprep.subr.bf16.mxu0 0
      %843 = vmatpush1.bf16.msra.mxu0 0
      %844 = vmatprep.mubr.bf16.mxu0 0
      %845 = vmatmul.mubr.bf16.gmra.mrb[0].mxu0 %v810
      %v846 = vpop.f32.mrb[0].mxu0
      %v847 = vadd.f32 0.0, %v846
      %v848 = vpop.f32.mrb[0].mxu0
      %v849 = vpop.f32.mrb[0].mxu0
      %v850 = vadd.f32 0.0, %v849
      %v851 = vpop.f32.mrb[0].mxu0
      %852 = vdwg.mxu0
      %v853 = vadd.f32 %v415, %v847
      %v854 = vadd.f32 %v416, %v850
      %v855 = vld [vmem:[%s5] sm:$0x1]
      %v857 = vlaneseq
      %v858 = vshrl.u32 %v857, 7
      %v859 = vsub.s32 0, %v858
      %v860 = vrot.slane %v855, %v859
      %v862 = vadd.f32 %v853, %v860
      %v863 = vadd.f32 %v854, %v860
      %v864 = vld [vmem:[%s6] sm:$0x1]
      %v865 = vld [vmem:[%s7] sm:$0x1]
      %v866 = vsel %vm419, %v862, 0.0
      %867 = vadd.xlane.f32.xlu0 %v866
      %v868 = vpop.xlane.xlu0 %867
      %v869 = vsel %vm419, %v863, 0.0
      %870 = vadd.xlane.f32.xlu0 %v869
      %v871 = vpop.xlane.xlu0 %870
      %v872 = vmul.f32 %v868, %v426
      %v873 = vmul.f32 %v871, %v426
      %v874 = vsub.f32 %v862, %v872
      %v875 = vsub.f32 %v863, %v873
      %v876 = vmul.f32 %v874, %v874
      %v877 = vmul.f32 %v875, %v875
      %v878 = vsel %vm419, %v876, 0.0
      %879 = vadd.xlane.f32.xlu0 %v878
      %v880 = vpop.xlane.xlu0 %879
      %v881 = vsel %vm419, %v877, 0.0
      %882 = vadd.xlane.f32.xlu0 %v881
      %v883 = vpop.xlane.xlu0 %882
      %v884 = vmul.f32 %v880, %v426
      %v885 = vmul.f32 %v883, %v426
      %v886 = vadd.f32 %v884, 1e-05
      %v887 = vadd.f32 %v885, 1e-05
      %v888 = vrsqrt.pop %v886
      %v889 = vrsqrt.pop %v887
      %v890 = vmul.f32 %v874, %v888
      %v891 = vmul.f32 %v875, %v889
      %v893 = vlaneseq
      %v894 = vshrl.u32 %v893, 7
      %v895 = vsub.s32 0, %v894
      %v896 = vrot.slane %v864, %v895
      %v898 = vmul.f32 %v890, %v896
      %v899 = vmul.f32 %v891, %v896
      %v901 = vlaneseq
      %v902 = vshrl.u32 %v901, 7
      %v903 = vsub.s32 0, %v902
      %v904 = vrot.slane %v865, %v903
      %v906 = vadd.f32 %v898, %v904
      %v907 = vadd.f32 %v899, %v904
      %v908 = vpack.c.bf16 %v907, %v906
      %v909 = vld [vmem:[%s8] sm:$0xf]
      %v910 = vld [vmem:[%s8 + $0x4] sm:$0xf]
      %v911 = vld [vmem:[%s8 + $0x8] sm:$0xf]
      %v912 = vld [vmem:[%s8 + $0xc] sm:$0xf]
      %v913 = vld [vmem:[%s9] sm:$0x1]
      %v915 = vlaneseq
      %v916 = vshrl.u32 %v915, 7
      %v917 = vsub.s32 0, %v916
      %v918 = vrot.slane %v913, %v917
      %v924 = vunpack.c.l.b16 %v909
      %v925 = vunpack.c.l.b16 %v910
      %v926 = vunpack.c.l.b16 %v911
      %v927 = vunpack.c.l.b16 %v912
      %v928 = vpack.c.b16 %v925, %v924
      %v929 = vpack.c.b16 %v927, %v926
      %v933 = vsel %vm419, %v908, 0
      %935 = vmatprep.subr.bf16.mxu0 0
      %936 = vmatpush1.bf16.msra.mxu0 %v928
      %937 = vmatprep.subr.bf16.mxu0 0
      %938 = vmatpush1.bf16.msra.mxu0 %v929
      %939 = vmatprep.subr.bf16.mxu0 0
      %940 = vmatpush1.bf16.msra.mxu0 0
      %941 = vmatprep.subr.bf16.mxu0 0
      %942 = vmatpush1.bf16.msra.mxu0 0
      %943 = vmatprep.subr.bf16.mxu0 0
      %944 = vmatpush1.bf16.msra.mxu0 0
      %945 = vmatprep.subr.bf16.mxu0 0
      %946 = vmatpush1.bf16.msra.mxu0 0
      %947 = vmatprep.subr.bf16.mxu0 0
      %948 = vmatpush1.bf16.msra.mxu0 0
      %949 = vmatprep.subr.bf16.mxu0 0
      %950 = vmatpush1.bf16.msra.mxu0 0
      %951 = vmatprep.subr.bf16.mxu0 0
      %952 = vmatpush1.bf16.msra.mxu0 0
      %953 = vmatprep.subr.bf16.mxu0 0
      %954 = vmatpush1.bf16.msra.mxu0 0
      %955 = vmatprep.subr.bf16.mxu0 0
      %956 = vmatpush1.bf16.msra.mxu0 0
      %957 = vmatprep.subr.bf16.mxu0 0
      %958 = vmatpush1.bf16.msra.mxu0 0
      %959 = vmatprep.subr.bf16.mxu0 0
      %960 = vmatpush1.bf16.msra.mxu0 0
      %961 = vmatprep.subr.bf16.mxu0 0
      %962 = vmatpush1.bf16.msra.mxu0 0
      %963 = vmatprep.subr.bf16.mxu0 0
      %964 = vmatpush1.bf16.msra.mxu0 0
      %965 = vmatprep.subr.bf16.mxu0 0
      %966 = vmatpush1.bf16.msra.mxu0 0
      %967 = vmatprep.mubr.bf16.mxu0 0
      %968 = vmatmul.mubr.bf16.gmra.mrb[0].mxu0 %v933
      %v969 = vpop.f32.mrb[0].mxu0
      %v970 = vadd.f32 %v918, %v969
      %v971 = vpop.f32.mrb[0].mxu0
      %v972 = vpop.f32.mrb[0].mxu0
      %v973 = vadd.f32 %v918, %v972
      %v974 = vpop.f32.mrb[0].mxu0
      %975 = vdwg.mxu0
      %v976 = vmul.f32 %v970, 0.5
      %v977 = vmul.f32 %v973, 0.5
      %v978 = vmul.f32 %v970, 0.70710677
      %v979 = vmul.f32 %v973, 0.70710677
      %vm980 = vcmp.ge.f32.partialorder %v978, 0.0
      %vm981 = vcmp.ge.f32.partialorder %v979, 0.0
      %v982 = vsel %vm980, 1.0, -1.0
      %v983 = vsel %vm981, 1.0, -1.0
      %v984 = vand.u32 2147483647, %v978
      %v985 = vand.u32 2147483647, %v979
      %v986 = vmul.f32 %v984, 0.3275911
      %v987 = vmul.f32 %v985, 0.3275911
      %v988 = vadd.f32 %v986, 1.0
      %v989 = vadd.f32 %v987, 1.0
      %v990 = vrcp.pop %v988
      %v991 = vmul.f32 1.0, %v990
      %v992 = vrcp.pop %v989
      %v993 = vmul.f32 1.0, %v992
      %v994 = vmul.f32 %v991, 1.0614054
      %v995 = vmul.f32 %v993, 1.0614054
      %v996 = vadd.f32 %v994, -1.4531521
      %v997 = vadd.f32 %v995, -1.4531521
      %v998 = vmul.f32 %v996, %v991
      %v999 = vmul.f32 %v997, %v993
      %v1000 = vadd.f32 %v998, 1.4214138
      %v1001 = vadd.f32 %v999, 1.4214138
      %v1002 = vmul.f32 %v1000, %v991
      %v1003 = vmul.f32 %v1001, %v993
      %v1004 = vadd.f32 %v1002, -0.28449672
      %v1005 = vadd.f32 %v1003, -0.28449672
      %v1006 = vmul.f32 %v1004, %v991
      %v1007 = vmul.f32 %v1005, %v993
      %v1008 = vadd.f32 %v1006, 0.2548296
      %v1009 = vadd.f32 %v1007, 0.2548296
      %v1010 = vmul.f32 %v1008, %v991
      %v1011 = vmul.f32 %v1009, %v993
      %v1012 = vsub.f32 0.0, %v984
      %v1013 = vsub.f32 0.0, %v985
      %v1014 = vmul.f32 %v1012, %v984
      %v1015 = vmul.f32 %v1013, %v985
      %v1016 = vmul.f32 %v1014, 1.442695
      %v1017 = vpow.pop %v1016
      %v1018 = vmul.f32 %v1015, 1.442695
      %v1019 = vpow.pop %v1018
      %v1020 = vmul.f32 %v1010, %v1017
      %v1021 = vmul.f32 %v1011, %v1019
      %v1022 = vsub.f32 1.0, %v1020
      %v1023 = vsub.f32 1.0, %v1021
      %v1024 = vmul.f32 %v982, %v1022
      %v1025 = vmul.f32 %v983, %v1023
      %v1026 = vadd.f32 %v1024, 1.0
      %v1027 = vadd.f32 %v1025, 1.0
      %v1028 = vmul.f32 %v976, %v1026
      %v1029 = vmul.f32 %v977, %v1027
      %v1030 = vpack.c.bf16 %v1029, %v1028
      %v1031 = vld [vmem:[%s10] sm:$0xf]
      %v1032 = vld [vmem:[%s10 + $0x4] sm:$0xf]
      %v1033 = vld [vmem:[%s10 + $0x8] sm:$0xf]
      %v1034 = vld [vmem:[%s10 + $0xc] sm:$0xf]
      %v1035 = vld [vmem:[%s10 + $0x10] sm:$0xf]
      %v1036 = vld [vmem:[%s10 + $0x14] sm:$0xf]
      %v1037 = vld [vmem:[%s10 + $0x18] sm:$0xf]
      %v1038 = vld [vmem:[%s10 + $0x1c] sm:$0xf]
      %v1039 = vld [vmem:[%s11] sm:$0x1]
      %v1041 = vlaneseq
      %v1042 = vshrl.u32 %v1041, 7
      %v1043 = vsub.s32 0, %v1042
      %v1044 = vrot.slane %v1039, %v1043
      %v1054 = vunpack.c.l.b16 %v1031
      %v1055 = vunpack.c.l.b16 %v1032
      %v1056 = vunpack.c.l.b16 %v1033
      %v1057 = vunpack.c.l.b16 %v1034
      %v1058 = vunpack.c.l.b16 %v1035
      %v1059 = vunpack.c.l.b16 %v1036
      %v1060 = vunpack.c.l.b16 %v1037
      %v1061 = vunpack.c.l.b16 %v1038
      %v1062 = vpack.c.b16 %v1055, %v1054
      %v1063 = vpack.c.b16 %v1057, %v1056
      %v1064 = vpack.c.b16 %v1059, %v1058
      %v1065 = vpack.c.b16 %v1061, %v1060
      %vm1070 = vcmask 523264
      %v1072 = vsel %vm1070, %v1030, 0
      %1074 = vmatprep.subr.bf16.mxu0 0
      %1075 = vmatpush1.bf16.msra.mxu0 %v1062
      %1076 = vmatprep.subr.bf16.mxu0 0
      %1077 = vmatpush1.bf16.msra.mxu0 %v1063
      %1078 = vmatprep.subr.bf16.mxu0 0
      %1079 = vmatpush1.bf16.msra.mxu0 %v1064
      %1080 = vmatprep.subr.bf16.mxu0 0
      %1081 = vmatpush1.bf16.msra.mxu0 %v1065
      %1082 = vmatprep.subr.bf16.mxu0 0
      %1083 = vmatpush1.bf16.msra.mxu0 0
      %1084 = vmatprep.subr.bf16.mxu0 0
      %1085 = vmatpush1.bf16.msra.mxu0 0
      %1086 = vmatprep.subr.bf16.mxu0 0
      %1087 = vmatpush1.bf16.msra.mxu0 0
      %1088 = vmatprep.subr.bf16.mxu0 0
      %1089 = vmatpush1.bf16.msra.mxu0 0
      %1090 = vmatprep.subr.bf16.mxu0 0
      %1091 = vmatpush1.bf16.msra.mxu0 0
      %1092 = vmatprep.subr.bf16.mxu0 0
      %1093 = vmatpush1.bf16.msra.mxu0 0
      %1094 = vmatprep.subr.bf16.mxu0 0
      %1095 = vmatpush1.bf16.msra.mxu0 0
      %1096 = vmatprep.subr.bf16.mxu0 0
      %1097 = vmatpush1.bf16.msra.mxu0 0
      %1098 = vmatprep.subr.bf16.mxu0 0
      %1099 = vmatpush1.bf16.msra.mxu0 0
      %1100 = vmatprep.subr.bf16.mxu0 0
      %1101 = vmatpush1.bf16.msra.mxu0 0
      %1102 = vmatprep.subr.bf16.mxu0 0
      %1103 = vmatpush1.bf16.msra.mxu0 0
      %1104 = vmatprep.subr.bf16.mxu0 0
      %1105 = vmatpush1.bf16.msra.mxu0 0
      %1106 = vmatprep.mubr.bf16.mxu0 0
      %1107 = vmatmul.mubr.bf16.gmra.mrb[0].mxu0 %v1072
      %v1108 = vpop.f32.mrb[0].mxu0
      %v1109 = vadd.f32 %v1044, %v1108
      %v1110 = vpop.f32.mrb[0].mxu0
      %v1111 = vpop.f32.mrb[0].mxu0
      %v1112 = vadd.f32 %v1044, %v1111
      %v1113 = vpop.f32.mrb[0].mxu0
      %1114 = vdwg.mxu0
      %v1115 = vadd.f32 %v862, %v1109
      %v1116 = vadd.f32 %v863, %v1112
      %1117 = vst.msk [vmem:[%s413] sm:$0xff] %vm419, %v1115
      %1118 = vst.msk [vmem:[%s413 + $0x8] sm:$0xff] %vm419, %v1116
      %p1119 = scmp.lt.s32.totalorder %s23, 1
      %s1120 = scalar_select %p1119, %s23, 1
      %s1121 = smul.addr %s1120, 2
      %s1122 = smul.addr %s1121, 8
      %s1123 = scalar_lea.vmem %s12, %s1122
      // Predicated region
      $region69: #{transformer_encoder_3d.4} parent=67 // pred_check
        %p1124 = pneg %p298
      $region70: #{transformer_encoder_3d.4} parent=67 // pred_check_branch
        %1126 = sbr.rel (%p1124) target = $region72
      $region71: #{transformer_encoder_3d.4} parent=67 // pred_region
        _
      $region72: #{transformer_encoder_3d.4} parent=67 // pred_fallthru
        _
    $region68: #{transformer_encoder_3d.4} parent=5 // pred_fallthru
      _
    %p1127 = scmp.le.s32.totalorder 2, %s18
    // Predicated region
    $region73: #{transformer_encoder_3d.4} parent=5 // pred_check
      %p1128 = pneg %p1127
    $region74: #{transformer_encoder_3d.4} parent=5 // pred_check_branch
      %1130 = sbr.rel (%p1128) target = $region76
    $region75: #{transformer_encoder_3d.4} parent=5 // pred_region
      %s1131 = ssub.s32 %s18, 2
      // Predicated region
      $region77: #{transformer_encoder_3d.4} parent=75 // pred_check
        %p1132 = pneg %p304
      $region78: #{transformer_encoder_3d.4} parent=75 // pred_check_branch
        %1134 = sbr.rel (%p1132) target = $region80
      $region79: #{transformer_encoder_3d.4} parent=75 // pred_region
        %p1135 = scmp.lt.s32.totalorder %s24, 1
        %s1136 = scalar_select %p1135, %s24, 1
        %s1137 = smul.addr %s1136, 2
        %s1138 = smul.addr %s1137, 8
        %s1139 = scalar_lea.vmem %s12, %s1138
      $region80: #{transformer_encoder_3d.4} parent=75 // pred_fallthru
        _
    $region76: #{transformer_encoder_3d.4} parent=5 // pred_fallthru
      _
  $region6: #{transformer_encoder_3d.4} parent=0 // loop_footer
    %s22 = sadd.s32 1, %s18
  $region7: #{transformer_encoder_3d.4} parent=0 // loop_footer_branch
    %17 = sbr.rel target = $region3
  $region8: #{transformer_encoder_3d.4} parent=0 // loop_exit
    _

</llo_original>
